<compile_context>
chip_gen: v6e
topology: v6e:2x2x1
jax: 0.10.0
libtpu: 0.0.40
codegen_flags: <defaults>
</compile_context>

<pallas_src>
import jax
import jax.numpy as jnp
from jax import lax
from jax.experimental import pallas as pl
from jax.experimental.pallas import tpu as pltpu

LN_EPS = 1e-5          # nn.LayerNorm default
LEAKY_SLOPE = 0.01     # nn.LeakyReLU default negative_slope


def _round_up(x, m):
    return ((x + m - 1) // m) * m


def _default_tile_max():
    """1024-row tiles on 128 MiB-VMEM chips (v5e/v6e), 512 on v7x (64 MiB/TC)."""
    try:
        if pltpu.get_tpu_info().vmem_capacity_bytes > (64 << 20):
            return 1024
    except Exception:
        pass
    return 512


def _choose_tile(M, tile_max):
    """Sublane-aligned row tile sized from M.

    Guarantees >= 2 grid steps whenever M > 8 so the 'parallel' grid axis can shard
    across both v7x TensorCores, and keeps padded-row waste in the tail block < one
    sublane group (8 rows) per step.
    """
    if M <= 8:
        return M                       # single full-extent block
    n_steps = max(2, pl.cdiv(M, tile_max))
    if n_steps % 2:
        n_steps += 1                   # balanced split across the two v7x cores
    return _round_up(pl.cdiv(M, n_steps), 8)


def _make_encoder_kernel(n_layers, matmul_dtype):
    """Fused kernel: for one row tile, run every Linear+LayerNorm+LeakyReLU layer
    back-to-back; activations never leave VMEM/vregs."""
    exact_f32 = jnp.dtype(matmul_dtype) == jnp.dtype(jnp.float32)
    precision = lax.Precision.HIGHEST if exact_f32 else None

    def kernel(x_ref, *refs):
        o_ref = refs[-1]
        p_refs = refs[:-1]                         # n_layers * (w, packed[b;gamma;beta])
        h = x_ref[...].astype(matmul_dtype)
        for l in range(n_layers):
            w_ref = p_refs[2 * l]
            bgb = p_refs[2 * l + 1][...]           # (3, d_out) f32: bias, gamma, beta
            # MXU matmul: matmul_dtype operands, f32 accumulate.
            z = jnp.dot(h, w_ref[...],
                        preferred_element_type=jnp.float32, precision=precision)
            z = z + bgb[0:1, :]
            # LayerNorm over the feature (lane) dim, statistics in f32.
            mean = jnp.mean(z, axis=-1, keepdims=True)
            c = z - mean
            var = jnp.mean(c * c, axis=-1, keepdims=True)
            y = c * lax.rsqrt(var + LN_EPS)
            y = y * bgb[1:2, :] + bgb[2:3, :]
            # LeakyReLU (f32 arithmetic -> v5e-safe).
            act = jnp.where(y >= 0, y, LEAKY_SLOPE * y)
            # Inter-layer activation lives in the matmul dtype (next matmul casts
            # anyway -> numerics unchanged); final layer stays f32 for the store.
            h = act.astype(matmul_dtype) if l + 1 < n_layers else act
        o_ref[...] = h.astype(o_ref.dtype)

    return kernel


def mlp_encoder_forward(x, params, *, tile_m=None, matmul_dtype=jnp.bfloat16,
                        out_dtype=None):
    """Fused MLPEncoder forward.

    x:      (M, D_in) float32 or bfloat16 (bf16 in -> bf16 compute/out, no extra cast op)
    params: list of (w (D_in, D_out), b (D_out,), gamma (D_out,), beta (D_out,))
    """
    M, d_in = x.shape
    n_layers = len(params)
    dims = [d_in] + [w.shape[1] for (w, _, _, _) in params]
    d_last = dims[-1]
    out_dtype = x.dtype if out_dtype is None else out_dtype

    tile_max = _default_tile_max() if tile_m is None else tile_m
    tile = _choose_tile(M, tile_max)
    grid = (pl.cdiv(M, tile),)        # partial tail block handled by Pallas (no jnp.pad)

    flat_inputs = [x]
    in_specs = [pl.BlockSpec((tile, d_in), lambda i: (i, 0))]
    for (w, b, g, be) in params:
        dprev, dout = w.shape
        # Weights stored in the matmul dtype (halves HBM->VMEM DMA in bf16 mode);
        # bias/gamma/beta packed into ONE (3, d_out) f32 operand per layer.
        flat_inputs += [w.astype(matmul_dtype),
                        jnp.stack([b, g, be]).astype(jnp.float32)]
        in_specs += [
            pl.BlockSpec((dprev, dout), lambda i: (0, 0)),   # grid-invariant blocks
            pl.BlockSpec((3, dout), lambda i: (0, 0)),
        ]

    # VMEM budget: double-buffered x/out tiles + (double-buffered) params + generous
    # f32 temporary slack; x2 headroom, clamped to [16 MiB, 56 MiB] (never the whole
    # 64 MiB of a v7x TensorCore).
    mm_bytes = jnp.dtype(matmul_dtype).itemsize
    dmax = max(dims)
    est = (2 * tile * d_in * jnp.dtype(x.dtype).itemsize
           + 2 * tile * d_last * jnp.dtype(out_dtype).itemsize
           + sum(2 * (dims[l] * dims[l + 1] * mm_bytes + 3 * dims[l + 1] * 4)
                 for l in range(n_layers))
           + 6 * tile * dmax * 4)
    vmem_limit = int(min(max(2 * est, 16 << 20), 56 << 20))

    return pl.pallas_call(
        _make_encoder_kernel(n_layers, matmul_dtype),
        out_shape=jax.ShapeDtypeStruct((M, d_last), out_dtype),
        grid_spec=pltpu.PrefetchScalarGridSpec(
            num_scalar_prefetch=0,
            grid=grid,
            in_specs=in_specs,
            out_specs=pl.BlockSpec((tile, d_last), lambda i: (i, 0)),
        ),
        compiler_params=pltpu.CompilerParams(
            dimension_semantics=("parallel",),   # megacore-shards row tiles on v7x
            vmem_limit_bytes=vmem_limit,
        ),
    )(*flat_inputs)


def init_mlp_encoder_params(key, input_size, hidden_sizes):
    """Deterministic parameter init matching the torch module's shapes."""
    params = []
    prev = input_size
    for h in hidden_sizes:
        key, kw, kb, kg, kbe = jax.random.split(key, 5)
        bound = 1.0 / (prev ** 0.5)   # torch nn.Linear default U(-1/sqrt(fan_in), ...)
        w = jax.random.uniform(kw, (prev, h), jnp.float32, -bound, bound)
        b = jax.random.uniform(kb, (h,), jnp.float32, -bound, bound)
        # LayerNorm defaults are weight=1, bias=0; perturb so the affine path is used.
        gamma = 1.0 + 0.1 * jax.random.normal(kg, (h,), jnp.float32)
        beta = 0.1 * jax.random.normal(kbe, (h,), jnp.float32)
        params.append((w, b, gamma, beta))
        prev = h
    return params


def mlp_encoder_reference(x, params):
    """Pure-JAX f32 reference of the torch forward pass."""
    for (w, b, gamma, beta) in params:
        h = x @ w + b
        mean = jnp.mean(h, axis=-1, keepdims=True)
        var = jnp.mean((h - mean) ** 2, axis=-1, keepdims=True)
        hn = (h - mean) / jnp.sqrt(var + LN_EPS)
        y = hn * gamma + beta
        x = jnp.where(y >= 0, y, LEAKY_SLOPE * y)
    return x


if __name__ == "__main__":
    key = jax.random.PRNGKey(0)
    k_x, k_p, k_x2 = jax.random.split(key, 3)

    batch = 16
    input_size = 64
    hidden_sizes = [128, 32]

    x = jax.random.normal(k_x, (batch, input_size), jnp.float32)
    params = init_mlp_encoder_params(k_p, input_size, hidden_sizes)
    ref = mlp_encoder_reference(x, params)

    # 1) Exact-semantics path: f32 operands at HIGHEST precision -> matches torch math.
    out_f32 = jax.block_until_ready(
        mlp_encoder_forward(x, params, matmul_dtype=jnp.float32))
    assert out_f32.shape == (batch, hidden_sizes[-1])
    assert jnp.allclose(out_f32, ref, atol=1e-4, rtol=1e-4)

    # 2) Fast path: bf16 MXU operands / bf16 inter-layer activations, f32 LN epilogue.
    out_bf16 = jax.block_until_ready(mlp_encoder_forward(x, params))
    assert out_bf16.shape == (batch, hidden_sizes[-1])
    assert jnp.allclose(out_bf16, ref, atol=1e-1, rtol=1e-1)

    # 3) Non-multiple batch: 300 rows -> tile=152, grid=(2,) partial tail block handled
    #    by Pallas (no host-side pad), "parallel" axis feeds both v7x cores.
    xl = jax.random.normal(k_x2, (300, input_size), jnp.float32)
    refl = mlp_encoder_reference(xl, params)
    outl = jax.block_until_ready(mlp_encoder_forward(xl, params))
    assert outl.shape == (300, hidden_sizes[-1])
    assert jnp.allclose(outl, refl, atol=1e-1, rtol=1e-1)

    # 4) bf16 end-to-end I/O: x supplied in bf16, bf16 output, no wrapper-side cast op.
    #    Reference is run on the bf16-quantized input so only kernel error is measured.
    x_bf = xl.astype(jnp.bfloat16)
    ref_bf = mlp_encoder_reference(x_bf.astype(jnp.float32), params)
    out_bf = jax.block_until_ready(mlp_encoder_forward(x_bf, params))
    assert out_bf.shape == (300, hidden_sizes[-1])
    assert out_bf.dtype == jnp.bfloat16
    assert jnp.allclose(out_bf.astype(jnp.float32), ref_bf, atol=1.5e-1, rtol=1.5e-1)

    print("KERNEL_OK")
</pallas_src>

<mosaic_0001>
module attributes {stable_mosaic.version = 11 : i64} {
  func.func @kernel(%arg0: i32, %arg1: memref<8x64xf32, #tpu.memory_space<vmem>>, %arg2: memref<64x128xf32, #tpu.memory_space<vmem>>, %arg3: memref<3x128xf32, #tpu.memory_space<vmem>>, %arg4: memref<128x32xf32, #tpu.memory_space<vmem>>, %arg5: memref<3x32xf32, #tpu.memory_space<vmem>>, %arg6: memref<8x32xf32, #tpu.memory_space<vmem>>) attributes {dimension_semantics = [#tpu.dimension_semantics<parallel>], iteration_bounds = array<i64: 2>, scalar_prefetch = 0 : i64, scratch_operands = 0 : i64, tpu.core_type = #tpu.core_type<tc>, window_params = [{transform_indices = @transform_0, window_bounds = array<i64: 8, 64>}, {pipeline_mode = #tpu.pipeline_mode<synchronous>, transform_indices = @transform_1, window_bounds = array<i64: 64, 128>}, {pipeline_mode = #tpu.pipeline_mode<synchronous>, transform_indices = @transform_2, window_bounds = array<i64: 3, 128>}, {pipeline_mode = #tpu.pipeline_mode<synchronous>, transform_indices = @transform_3, window_bounds = array<i64: 128, 32>}, {pipeline_mode = #tpu.pipeline_mode<synchronous>, transform_indices = @transform_4, window_bounds = array<i64: 3, 32>}, {transform_indices = @transform_5, window_bounds = array<i64: 8, 32>}]} {
    %c0 = arith.constant 0 : index
    %c0_0 = arith.constant 0 : index
    %0 = vector.load %arg1[%c0, %c0_0] : memref<8x64xf32, #tpu.memory_space<vmem>>, vector<8x64xf32>
    %c0_1 = arith.constant 0 : index
    %c0_2 = arith.constant 0 : index
    %1 = vector.load %arg3[%c0_1, %c0_2] : memref<3x128xf32, #tpu.memory_space<vmem>>, vector<3x128xf32>
    %c0_3 = arith.constant 0 : index
    %c0_4 = arith.constant 0 : index
    %2 = vector.load %arg2[%c0_3, %c0_4] : memref<64x128xf32, #tpu.memory_space<vmem>>, vector<64x128xf32>
    %cst = arith.constant dense<0.000000e+00> : vector<8x128xf32>
    %3 = tpu.matmul %0, %2, %cst {dimension_numbers = #tpu.dot_dimension_numbers<[1], [0], [0], [1], [0, 0, 1, 1], [], []>, precision = #tpu.contract_precision<fp32>} : vector<8x64xf32>, vector<64x128xf32>, vector<8x128xf32> -> vector<8x128xf32>
    %4 = vector.extract_strided_slice %1 {offsets = [0, 0], sizes = [1, 128], strides = [1, 1]} : vector<3x128xf32> to vector<1x128xf32>
    %5 = vector.broadcast %4 : vector<1x128xf32> to vector<8x128xf32>
    %6 = arith.addf %3, %5 : vector<8x128xf32>
    %cst_5 = arith.constant dense<0.000000e+00> : vector<8xf32>
    %7 = vector.multi_reduction <add>, %6, %cst_5 [1] : vector<8x128xf32> to vector<8xf32>
    %8 = vector.shape_cast %7 : vector<8xf32> to vector<8x1xf32>
    %cst_6 = arith.constant 1.280000e+02 : f32
    %9 = vector.broadcast %cst_6 : f32 to vector<8x1xf32>
    %10 = arith.divf %8, %9 : vector<8x1xf32>
    %11 = vector.broadcast %10 : vector<8x1xf32> to vector<8x128xf32>
    %12 = arith.subf %6, %11 : vector<8x128xf32>
    %13 = arith.mulf %12, %12 : vector<8x128xf32>
    %cst_7 = arith.constant dense<0.000000e+00> : vector<8xf32>
    %14 = vector.multi_reduction <add>, %13, %cst_7 [1] : vector<8x128xf32> to vector<8xf32>
    %15 = vector.shape_cast %14 : vector<8xf32> to vector<8x1xf32>
    %cst_8 = arith.constant 1.280000e+02 : f32
    %16 = vector.broadcast %cst_8 : f32 to vector<8x1xf32>
    %17 = arith.divf %15, %16 : vector<8x1xf32>
    %cst_9 = arith.constant 9.99999974E-6 : f32
    %18 = vector.broadcast %cst_9 : f32 to vector<8x1xf32>
    %19 = arith.addf %17, %18 : vector<8x1xf32>
    %20 = math.rsqrt %19 : vector<8x1xf32>
    %21 = vector.broadcast %20 : vector<8x1xf32> to vector<8x128xf32>
    %22 = arith.mulf %12, %21 : vector<8x128xf32>
    %23 = vector.extract_strided_slice %1 {offsets = [1, 0], sizes = [1, 128], strides = [1, 1]} : vector<3x128xf32> to vector<1x128xf32>
    %24 = vector.broadcast %23 : vector<1x128xf32> to vector<8x128xf32>
    %25 = arith.mulf %22, %24 : vector<8x128xf32>
    %26 = vector.extract_strided_slice %1 {offsets = [2, 0], sizes = [1, 128], strides = [1, 1]} : vector<3x128xf32> to vector<1x128xf32>
    %27 = vector.broadcast %26 : vector<1x128xf32> to vector<8x128xf32>
    %28 = arith.addf %25, %27 : vector<8x128xf32>
    %cst_10 = arith.constant 0.000000e+00 : f32
    %29 = vector.broadcast %cst_10 : f32 to vector<8x128xf32>
    %30 = arith.cmpf oge, %28, %29 : vector<8x128xf32>
    %cst_11 = arith.constant 0.00999999977 : f32
    %31 = vector.broadcast %cst_11 : f32 to vector<8x128xf32>
    %32 = arith.mulf %31, %28 : vector<8x128xf32>
    %33 = arith.select %30, %28, %32 : vector<8x128xi1>, vector<8x128xf32>
    %c0_12 = arith.constant 0 : index
    %c0_13 = arith.constant 0 : index
    %34 = vector.load %arg5[%c0_12, %c0_13] : memref<3x32xf32, #tpu.memory_space<vmem>>, vector<3x32xf32>
    %c0_14 = arith.constant 0 : index
    %c0_15 = arith.constant 0 : index
    %35 = vector.load %arg4[%c0_14, %c0_15] : memref<128x32xf32, #tpu.memory_space<vmem>>, vector<128x32xf32>
    %cst_16 = arith.constant dense<0.000000e+00> : vector<8x32xf32>
    %36 = tpu.matmul %33, %35, %cst_16 {dimension_numbers = #tpu.dot_dimension_numbers<[1], [0], [0], [1], [0, 0, 1, 1], [], []>, precision = #tpu.contract_precision<fp32>} : vector<8x128xf32>, vector<128x32xf32>, vector<8x32xf32> -> vector<8x32xf32>
    %37 = vector.extract_strided_slice %34 {offsets = [0, 0], sizes = [1, 32], strides = [1, 1]} : vector<3x32xf32> to vector<1x32xf32>
    %38 = vector.broadcast %37 : vector<1x32xf32> to vector<8x32xf32>
    %39 = arith.addf %36, %38 : vector<8x32xf32>
    %cst_17 = arith.constant dense<0.000000e+00> : vector<8xf32>
    %40 = vector.multi_reduction <add>, %39, %cst_17 [1] : vector<8x32xf32> to vector<8xf32>
    %41 = vector.shape_cast %40 : vector<8xf32> to vector<8x1xf32>
    %cst_18 = arith.constant 3.200000e+01 : f32
    %42 = vector.broadcast %cst_18 : f32 to vector<8x1xf32>
    %43 = arith.divf %41, %42 : vector<8x1xf32>
    %44 = vector.broadcast %43 : vector<8x1xf32> to vector<8x32xf32>
    %45 = arith.subf %39, %44 : vector<8x32xf32>
    %46 = arith.mulf %45, %45 : vector<8x32xf32>
    %cst_19 = arith.constant dense<0.000000e+00> : vector<8xf32>
    %47 = vector.multi_reduction <add>, %46, %cst_19 [1] : vector<8x32xf32> to vector<8xf32>
    %48 = vector.shape_cast %47 : vector<8xf32> to vector<8x1xf32>
    %cst_20 = arith.constant 3.200000e+01 : f32
    %49 = vector.broadcast %cst_20 : f32 to vector<8x1xf32>
    %50 = arith.divf %48, %49 : vector<8x1xf32>
    %cst_21 = arith.constant 9.99999974E-6 : f32
    %51 = vector.broadcast %cst_21 : f32 to vector<8x1xf32>
    %52 = arith.addf %50, %51 : vector<8x1xf32>
    %53 = math.rsqrt %52 : vector<8x1xf32>
    %54 = vector.broadcast %53 : vector<8x1xf32> to vector<8x32xf32>
    %55 = arith.mulf %45, %54 : vector<8x32xf32>
    %56 = vector.extract_strided_slice %34 {offsets = [1, 0], sizes = [1, 32], strides = [1, 1]} : vector<3x32xf32> to vector<1x32xf32>
    %57 = vector.broadcast %56 : vector<1x32xf32> to vector<8x32xf32>
    %58 = arith.mulf %55, %57 : vector<8x32xf32>
    %59 = vector.extract_strided_slice %34 {offsets = [2, 0], sizes = [1, 32], strides = [1, 1]} : vector<3x32xf32> to vector<1x32xf32>
    %60 = vector.broadcast %59 : vector<1x32xf32> to vector<8x32xf32>
    %61 = arith.addf %58, %60 : vector<8x32xf32>
    %cst_22 = arith.constant 0.000000e+00 : f32
    %62 = vector.broadcast %cst_22 : f32 to vector<8x32xf32>
    %63 = arith.cmpf oge, %61, %62 : vector<8x32xf32>
    %cst_23 = arith.constant 0.00999999977 : f32
    %64 = vector.broadcast %cst_23 : f32 to vector<8x32xf32>
    %65 = arith.mulf %64, %61 : vector<8x32xf32>
    %66 = arith.select %63, %61, %65 : vector<8x32xi1>, vector<8x32xf32>
    %c0_24 = arith.constant 0 : index
    %c0_25 = arith.constant 0 : index
    %67 = vector.load %arg6[%c0_24, %c0_25] : memref<8x32xf32, #tpu.memory_space<vmem>>, vector<8x32xf32>
    tpu.vector_store %arg6[%c0_24, %c0_25], %66 {strides = array<i32>} : memref<8x32xf32, #tpu.memory_space<vmem>>, vector<8x32xf32>,
    return
  }
  func.func @transform_0(%arg0: i32) -> (i32, i32) {
    %c0_i32 = arith.constant 0 : i32
    %c0_i32_0 = arith.constant 0 : i32
    return %arg0, %c0_i32 : i32, i32
  }
  func.func @transform_1(%arg0: i32) -> (i32, i32) {
    %c0_i32 = arith.constant 0 : i32
    %c0_i32_0 = arith.constant 0 : i32
    %c0_i32_1 = arith.constant 0 : i32
    return %c0_i32, %c0_i32_0 : i32, i32
  }
  func.func @transform_2(%arg0: i32) -> (i32, i32) {
    %c0_i32 = arith.constant 0 : i32
    %c0_i32_0 = arith.constant 0 : i32
    %c0_i32_1 = arith.constant 0 : i32
    return %c0_i32, %c0_i32_0 : i32, i32
  }
  func.func @transform_3(%arg0: i32) -> (i32, i32) {
    %c0_i32 = arith.constant 0 : i32
    %c0_i32_0 = arith.constant 0 : i32
    %c0_i32_1 = arith.constant 0 : i32
    return %c0_i32, %c0_i32_0 : i32, i32
  }
  func.func @transform_4(%arg0: i32) -> (i32, i32) {
    %c0_i32 = arith.constant 0 : i32
    %c0_i32_0 = arith.constant 0 : i32
    %c0_i32_1 = arith.constant 0 : i32
    return %c0_i32, %c0_i32_0 : i32, i32
  }
  func.func @transform_5(%arg0: i32) -> (i32, i32) {
    %c0_i32 = arith.constant 0 : i32
    %c0_i32_0 = arith.constant 0 : i32
    return %arg0, %c0_i32 : i32, i32
  }
}

</mosaic_0001>

<llo_original>
// kernel: tpu_custom_call.1
$region0: #{tpu_custom_call.1}
  #allocation0 [shape = 'u32[]', space=smem, size = 0x4, offset = 0x4, fixed_abs, tag = 'smem constant byte address 0x4 - core index']
  #allocation1 [shape = 'u32[144,128]{1,0:T(1,128)}', space=vmem, size = 0x12000, scoped, tag = 'internal scratch']
  %s0 = inlined_call_operand.vmem [shape: f32[16,64], index: 0, kind: input, shape index: {}]
  %s1 = inlined_call_operand.vmem [shape: f32[64,128], index: 1, kind: input, shape index: {}]
  %s2 = inlined_call_operand.vmem [shape: f32[3,128], index: 2, kind: input, shape index: {}]
  %s3 = inlined_call_operand.vmem [shape: f32[128,32], index: 3, kind: input, shape index: {}]
  %s4 = inlined_call_operand.vmem [shape: f32[3,32], index: 4, kind: input, shape index: {}]
  %s5 = inlined_call_operand.hbm [shape: f32[16,32], index: 5, kind: output, shape index: {}]
  %s6 = sld [smem:[#allocation0]]
  $region53: #{tpu_custom_call.1} parent=0
    _
  %s8 = ssub.s32 1, %s6
  %s9 = scalar_select 0, %s8, %s6
  $region1: #{tpu_custom_call.1} parent=0
    #allocation2 [shape = 'u8[8192]{0}', space=vmem, size = 0x2000, scoped, tag = 'output window, operand 0']
    #allocation3 [shape = 's32[2]{0}', space=sflag, size = 0x8, scoped, tag = 'scoped memory for tpu_custom_call.1']
    %10 = vsyncpa [#allocation3], 0
    %s11 = scalar_lea.sflag [#allocation3], 1
    %12 = vsyncpa %s11, 0
    loop: start=0, step=1, limit=4
    $region2: #{tpu_custom_call.1} parent=1 // loop_pre_header
      _
    $region3: #{tpu_custom_call.1} parent=1 // loop_header
      %s14 = sphi 0, %s18
      %p15 = scmp.ge.s32.totalorder %s14, 4
      %s24 = sphi 0, %s26
      %s27 = sphi 0, %s24
      %s28 = sphi 0, %s27
      %s44 = sphi 0, %s28
      %s48 = sphi 0, %s48
      %s50 = sphi 0, %s48
      %s51 = sphi 0, %s50
      %s65 = sphi 0, %s51
      %s69 = sphi 0, %s69
      %s71 = sphi 0, %s69
      %s72 = sphi 0, %s71
      %s86 = sphi 0, %s72
      %s90 = sphi 0, %s90
      %s92 = sphi 0, %s90
      %s93 = sphi 0, %s92
      %s107 = sphi 0, %s93
      %s111 = sphi 0, %s111
      %s113 = sphi 0, %s111
      %s114 = sphi 0, %s113
      %s128 = sphi 0, %s114
      %s134 = sphi 0, %s136
      %s137 = sphi 0, %s134
      %s138 = sphi 0, %s137
      %s154 = sphi 0, %s138
    $region4: #{tpu_custom_call.1} parent=1 // loop_header_branch
      %17 = sbr.rel (%p15) target = $region8
    $region5: #{tpu_custom_call.1} parent=1 // loop_body
      %s19 = ssub.s32 %s14, 1
      %s20 = ssub.s32 %s14, 2
      %s21 = sadd.s32 %s14, 1
      %s22 = ssub.s32 %s14, %s21
      %p23 = scmp.eq.s32.totalorder %s22, 0
      %s25 = sadd.s32 %s24, 1
      %s26 = scalar_select %p23, %s24, %s25
      %p29 = pneg %p23
      %p30 = scmp.eq.s32.totalorder %s14, 1
      %p31 = por %p29, %p30
      %p32 = scmp.ne.s32.totalorder %s24, %s27
      %p33 = scmp.eq.s32.totalorder %s14, 0
      %p34 = por %p32, %p33
      %p35 = scmp.ne.s32.totalorder %s24, %s27
      %p36 = scmp.eq.s32.totalorder %s19, 1
      %p37 = por %p35, %p36
      %p38 = scmp.ne.s32.totalorder %s27, %s28
      %p39 = scmp.eq.s32.totalorder %s19, 0
      %p40 = por %p38, %p39
      %p41 = scmp.ne.s32.totalorder %s27, %s28
      %p42 = scmp.eq.s32.totalorder %s20, 1
      %p43 = por %p41, %p42
      %p45 = scmp.ne.s32.totalorder %s28, %s44
      %p46 = scmp.eq.s32.totalorder %s20, 0
      %p47 = por %p45, %p46
      %s49 = sadd.s32 %s48, 1
      %p52 = scmp.eq.s32.totalorder %s14, 1
      %p53 = scmp.ne.s32.totalorder %s48, %s50
      %p54 = scmp.eq.s32.totalorder %s14, 0
      %p55 = por %p53, %p54
      %p56 = scmp.ne.s32.totalorder %s48, %s50
      %p57 = scmp.eq.s32.totalorder %s19, 1
      %p58 = por %p56, %p57
      %p59 = scmp.ne.s32.totalorder %s50, %s51
      %p60 = scmp.eq.s32.totalorder %s19, 0
      %p61 = por %p59, %p60
      %p62 = scmp.ne.s32.totalorder %s50, %s51
      %p63 = scmp.eq.s32.totalorder %s20, 1
      %p64 = por %p62, %p63
      %p66 = scmp.ne.s32.totalorder %s51, %s65
      %p67 = scmp.eq.s32.totalorder %s20, 0
      %p68 = por %p66, %p67
      %s70 = sadd.s32 %s69, 1
      %p73 = scmp.eq.s32.totalorder %s14, 1
      %p74 = scmp.ne.s32.totalorder %s69, %s71
      %p75 = scmp.eq.s32.totalorder %s14, 0
      %p76 = por %p74, %p75
      %p77 = scmp.ne.s32.totalorder %s69, %s71
      %p78 = scmp.eq.s32.totalorder %s19, 1
      %p79 = por %p77, %p78
      %p80 = scmp.ne.s32.totalorder %s71, %s72
      %p81 = scmp.eq.s32.totalorder %s19, 0
      %p82 = por %p80, %p81
      %p83 = scmp.ne.s32.totalorder %s71, %s72
      %p84 = scmp.eq.s32.totalorder %s20, 1
      %p85 = por %p83, %p84
      %p87 = scmp.ne.s32.totalorder %s72, %s86
      %p88 = scmp.eq.s32.totalorder %s20, 0
      %p89 = por %p87, %p88
      %s91 = sadd.s32 %s90, 1
      %p94 = scmp.eq.s32.totalorder %s14, 1
      %p95 = scmp.ne.s32.totalorder %s90, %s92
      %p96 = scmp.eq.s32.totalorder %s14, 0
      %p97 = por %p95, %p96
      %p98 = scmp.ne.s32.totalorder %s90, %s92
      %p99 = scmp.eq.s32.totalorder %s19, 1
      %p100 = por %p98, %p99
      %p101 = scmp.ne.s32.totalorder %s92, %s93
      %p102 = scmp.eq.s32.totalorder %s19, 0
      %p103 = por %p101, %p102
      %p104 = scmp.ne.s32.totalorder %s92, %s93
      %p105 = scmp.eq.s32.totalorder %s20, 1
      %p106 = por %p104, %p105
      %p108 = scmp.ne.s32.totalorder %s93, %s107
      %p109 = scmp.eq.s32.totalorder %s20, 0
      %p110 = por %p108, %p109
      %s112 = sadd.s32 %s111, 1
      %p115 = scmp.eq.s32.totalorder %s14, 1
      %p116 = scmp.ne.s32.totalorder %s111, %s113
      %p117 = scmp.eq.s32.totalorder %s14, 0
      %p118 = por %p116, %p117
      %p119 = scmp.ne.s32.totalorder %s111, %s113
      %p120 = scmp.eq.s32.totalorder %s19, 1
      %p121 = por %p119, %p120
      %p122 = scmp.ne.s32.totalorder %s113, %s114
      %p123 = scmp.eq.s32.totalorder %s19, 0
      %p124 = por %p122, %p123
      %p125 = scmp.ne.s32.totalorder %s113, %s114
      %p126 = scmp.eq.s32.totalorder %s20, 1
      %p127 = por %p125, %p126
      %p129 = scmp.ne.s32.totalorder %s114, %s128
      %p130 = scmp.eq.s32.totalorder %s20, 0
      %p131 = por %p129, %p130
      %s132 = ssub.s32 %s14, %s21
      %p133 = scmp.eq.s32.totalorder %s132, 0
      %s135 = sadd.s32 %s134, 1
      %s136 = scalar_select %p133, %s134, %s135
      %p139 = pneg %p133
      %p140 = scmp.eq.s32.totalorder %s14, 1
      %p141 = por %p139, %p140
      %p142 = scmp.ne.s32.totalorder %s134, %s137
      %p143 = scmp.eq.s32.totalorder %s14, 0
      %p144 = por %p142, %p143
      %p145 = scmp.ne.s32.totalorder %s134, %s137
      %p146 = scmp.eq.s32.totalorder %s19, 1
      %p147 = por %p145, %p146
      %p148 = scmp.ne.s32.totalorder %s137, %s138
      %p149 = scmp.eq.s32.totalorder %s19, 0
      %p150 = por %p148, %p149
      %p151 = scmp.ne.s32.totalorder %s137, %s138
      %p152 = scmp.eq.s32.totalorder %s20, 1
      %p153 = por %p151, %p152
      %p155 = scmp.ne.s32.totalorder %s138, %s154
      %p156 = scmp.eq.s32.totalorder %s20, 0
      %p157 = por %p155, %p156
      %p158 = scmp.le.s32.totalorder 1, %s14
      %p159 = scmp.lt.s32.totalorder %s14, 3
      %p160 = pnand %p158, %p159
      %p161 = pneg %p160
      // Predicated region
      $region9: #{tpu_custom_call.1} parent=5 // pred_check
        _
      $region10: #{tpu_custom_call.1} parent=5 // pred_check_branch
        %163 = sbr.rel (%p160) target = $region12
      $region11: #{tpu_custom_call.1} parent=5 // pred_region
        %s164 = ssub.s32 %s14, 1
        // Predicated region
        $region13: #{tpu_custom_call.1} parent=11 // pred_check
          %p165 = pneg %p61
        $region14: #{tpu_custom_call.1} parent=11 // pred_check_branch
          %167 = sbr.rel (%p165) target = $region16
        $region15: #{tpu_custom_call.1} parent=11 // pred_region
          _
        $region16: #{tpu_custom_call.1} parent=11 // pred_fallthru
          _
        // Predicated region
        $region17: #{tpu_custom_call.1} parent=11 // pred_check
          %p168 = pneg %p82
        $region18: #{tpu_custom_call.1} parent=11 // pred_check_branch
          %170 = sbr.rel (%p168) target = $region20
        $region19: #{tpu_custom_call.1} parent=11 // pred_region
          _
        $region20: #{tpu_custom_call.1} parent=11 // pred_fallthru
          _
        // Predicated region
        $region21: #{tpu_custom_call.1} parent=11 // pred_check
          %p171 = pneg %p103
        $region22: #{tpu_custom_call.1} parent=11 // pred_check_branch
          %173 = sbr.rel (%p171) target = $region24
        $region23: #{tpu_custom_call.1} parent=11 // pred_region
          _
        $region24: #{tpu_custom_call.1} parent=11 // pred_fallthru
          _
        // Predicated region
        $region25: #{tpu_custom_call.1} parent=11 // pred_check
          %p174 = pneg %p124
        $region26: #{tpu_custom_call.1} parent=11 // pred_check_branch
          %176 = sbr.rel (%p174) target = $region28
        $region27: #{tpu_custom_call.1} parent=11 // pred_region
          _
        $region28: #{tpu_custom_call.1} parent=11 // pred_fallthru
          _
      $region12: #{tpu_custom_call.1} parent=5 // pred_fallthru
        _
      %p177 = scmp.lt.s32.totalorder %s14, 2
      // Predicated region
      $region29: #{tpu_custom_call.1} parent=5 // pred_check
        %p178 = pneg %p177
      $region30: #{tpu_custom_call.1} parent=5 // pred_check_branch
        %180 = sbr.rel (%p178) target = $region32
      $region31: #{tpu_custom_call.1} parent=5 // pred_region
        // Predicated region
        $region33: #{tpu_custom_call.1} parent=31 // pred_check
          %p181 = pneg %p34
        $region34: #{tpu_custom_call.1} parent=31 // pred_check_branch
          %183 = sbr.rel (%p181) target = $region36
        $region35: #{tpu_custom_call.1} parent=31 // pred_region
          %p184 = scmp.lt.s32.totalorder %s14, 1
          %s185 = scalar_select %p184, %s14, 1
          %s186 = smul.addr %s185, 8
          %s187 = scalar_lea.vmem %s0, %s186
        $region36: #{tpu_custom_call.1} parent=31 // pred_fallthru
          _
      $region32: #{tpu_custom_call.1} parent=5 // pred_fallthru
        _
      %p188 = scmp.le.s32.totalorder 1, %s14
      %p189 = scmp.lt.s32.totalorder %s14, 3
      %p190 = pnand %p188, %p189
      %p191 = pneg %p190
      // Predicated region
      $region37: #{tpu_custom_call.1} parent=5 // pred_check
        _
      $region38: #{tpu_custom_call.1} parent=5 // pred_check_branch
        %193 = sbr.rel (%p190) target = $region40
      $region39: #{tpu_custom_call.1} parent=5 // pred_region
        %s194 = ssub.s32 %s14, 1
        %p195 = scmp.lt.s32.totalorder %s19, 1
        %s196 = scalar_select %p195, %s19, 1
        %s197 = smul.addr %s196, 8
        %s198 = scalar_lea.vmem %s0, %s197
        %p199 = pneg %p40
        %p200 = pneg %p37
        %p201 = pneg %p61
        %p202 = pneg %p58
        %p203 = pneg %p82
        %p204 = pneg %p79
        %p205 = pneg %p103
        %p206 = pneg %p100
        %p207 = pneg %p124
        %p208 = pneg %p121
        %p209 = pneg %p150
        %p210 = pneg %p147
        %s211 = sand.u32 %s137, 1
        %s212 = scalar_lea.sflag [#allocation3], %s211
        %s213 = sand.u32 %s137, 1
        %s214 = smul.addr %s213, 8
        %s215 = scalar_lea.vmem [#allocation2], %s214
        %p216 = scmp.lt.s32.totalorder %s19, 1
        %s217 = scalar_select %p216, %s19, 1
        %s218 = smul.addr %s217, 8
        %s219 = scalar_lea.vmem %s0, %s218
        %v220 = vld [vmem:[%s219] sm:$0xff]
        %v221 = vld [vmem:[%s2] sm:$0x7]
        %v222 = vld [vmem:[%s1] sm:$0xff]
        %v223 = vld [vmem:[%s1 + $0x8] sm:$0xff]
        %v224 = vld [vmem:[%s1 + $0x10] sm:$0xff]
        %v225 = vld [vmem:[%s1 + $0x18] sm:$0xff]
        %v226 = vld [vmem:[%s1 + $0x20] sm:$0xff]
        %v227 = vld [vmem:[%s1 + $0x28] sm:$0xff]
        %v228 = vld [vmem:[%s1 + $0x30] sm:$0xff]
        %v229 = vld [vmem:[%s1 + $0x38] sm:$0xff]
        %v230 = vlaneseq
        %v231 = vshrl.u32 %v230, 7
        %v232 = vsub.s32 0, %v231
        %v233 = vrot.slane %v221, %v232
        %vm234 = vcmask 523264
        %v236 = vsel %vm234, %v220, 0
        %238 = vmatprep.subr.mxu0 0.0
        %239 = vmatpush1.msra.mxu0 0.0
        %240 = vmatprep.subr.mxu0 0.0
        %241 = vmatpush1.msra.mxu0 0.0
        %242 = vmatprep.subr.mxu0 0.0
        %243 = vmatpush1.msra.mxu0 0.0
        %244 = vmatprep.subr.mxu0 0.0
        %245 = vmatpush1.msra.mxu0 0.0
        %246 = vmatprep.subr.mxu0 0.0
        %247 = vmatpush1.msra.mxu0 0.0
        %248 = vmatprep.subr.mxu0 0.0
        %249 = vmatpush1.msra.mxu0 0.0
        %250 = vmatprep.subr.mxu0 0.0
        %251 = vmatpush1.msra.mxu0 0.0
        %252 = vmatprep.subr.mxu0 0.0
        %253 = vmatpush1.msra.mxu0 0.0
        %254 = vmatprep.subr.mxu0 0.0
        %v255 = vand.u32 %v229, 4294901760
        %256 = vmatpush1.msra.mxu0 %v255
        %257 = vmatprep.subr.mxu0 0.0
        %v258 = vand.u32 %v228, 4294901760
        %259 = vmatpush1.msra.mxu0 %v258
        %260 = vmatprep.subr.mxu0 0.0
        %v261 = vand.u32 %v227, 4294901760
        %262 = vmatpush1.msra.mxu0 %v261
        %263 = vmatprep.subr.mxu0 0.0
        %v264 = vand.u32 %v226, 4294901760
        %265 = vmatpush1.msra.mxu0 %v264
        %266 = vmatprep.subr.mxu0 0.0
        %v267 = vand.u32 %v225, 4294901760
        %268 = vmatpush1.msra.mxu0 %v267
        %269 = vmatprep.subr.mxu0 0.0
        %v270 = vand.u32 %v224, 4294901760
        %271 = vmatpush1.msra.mxu0 %v270
        %272 = vmatprep.subr.mxu0 0.0
        %v273 = vand.u32 %v223, 4294901760
        %274 = vmatpush1.msra.mxu0 %v273
        %275 = vmatprep.subr.mxu0 0.0
        %v276 = vand.u32 %v222, 4294901760
        %277 = vmatpush1.msra.mxu0 %v276
        %278 = vmatprep.subr.mxu0 0.0
        %279 = vmatpush2.msra.mxu0 0.0
        %280 = vmatprep.subr.mxu0 0.0
        %281 = vmatpush2.msra.mxu0 0.0
        %282 = vmatprep.subr.mxu0 0.0
        %283 = vmatpush2.msra.mxu0 0.0
        %284 = vmatprep.subr.mxu0 0.0
        %285 = vmatpush2.msra.mxu0 0.0
        %286 = vmatprep.subr.mxu0 0.0
        %287 = vmatpush2.msra.mxu0 0.0
        %288 = vmatprep.subr.mxu0 0.0
        %289 = vmatpush2.msra.mxu0 0.0
        %290 = vmatprep.subr.mxu0 0.0
        %291 = vmatpush2.msra.mxu0 0.0
        %292 = vmatprep.subr.mxu0 0.0
        %293 = vmatpush2.msra.mxu0 0.0
        %294 = vmatprep.subr.mxu0 0.0
        %295 = vmatpush2.msra.mxu0 0.0
        %296 = vmatprep.subr.mxu0 0.0
        %297 = vmatpush2.msra.mxu0 0.0
        %298 = vmatprep.subr.mxu0 0.0
        %299 = vmatpush2.msra.mxu0 0.0
        %300 = vmatprep.subr.mxu0 0.0
        %301 = vmatpush2.msra.mxu0 0.0
        %302 = vmatprep.subr.mxu0 0.0
        %303 = vmatpush2.msra.mxu0 0.0
        %304 = vmatprep.subr.mxu0 0.0
        %305 = vmatpush2.msra.mxu0 0.0
        %306 = vmatprep.subr.mxu0 0.0
        %307 = vmatpush2.msra.mxu0 0.0
        %308 = vmatprep.subr.mxu0 0.0
        %309 = vmatpush2.msra.mxu0 0.0
        %310 = vmatprep.mubr.f32.mxu0 0.0
        %v311 = vand.u32 %v236, 4294901760
        %v312 = vsub.f32 %v236, %v311
        %v313 = vand.u32 %v312, 4294901760
        %v314 = vsub.f32 %v312, %v313
        %v315 = vand.u32 %v314, 4294901760
        %316 = vmatmul.mubr.f32.gmra.mxu0 %v315
        %v317 = vpop.f32.mrf.mxu0
        %v318 = vadd.f32 %v233, %v317
        %v319 = vpop.f32.mrf.mxu0
        %320 = vdwg.mxu0
        %321 = vmatprep.subr.mxu0 0.0
        %322 = vmatpush1.msra.mxu0 0.0
        %323 = vmatprep.subr.mxu0 0.0
        %324 = vmatpush1.msra.mxu0 0.0
        %325 = vmatprep.subr.mxu0 0.0
        %326 = vmatpush1.msra.mxu0 0.0
        %327 = vmatprep.subr.mxu0 0.0
        %328 = vmatpush1.msra.mxu0 0.0
        %329 = vmatprep.subr.mxu0 0.0
        %330 = vmatpush1.msra.mxu0 0.0
        %331 = vmatprep.subr.mxu0 0.0
        %332 = vmatpush1.msra.mxu0 0.0
        %333 = vmatprep.subr.mxu0 0.0
        %334 = vmatpush1.msra.mxu0 0.0
        %335 = vmatprep.subr.mxu0 0.0
        %336 = vmatpush1.msra.mxu0 0.0
        %337 = vmatprep.subr.mxu0 0.0
        %v338 = vand.u32 %v229, 4294901760
        %v339 = vsub.f32 %v229, %v338
        %v340 = vand.u32 %v339, 4294901760
        %v341 = vsub.f32 %v339, %v340
        %v342 = vand.u32 %v341, 4294901760
        %343 = vmatpush1.msra.mxu0 %v342
        %344 = vmatprep.subr.mxu0 0.0
        %v345 = vand.u32 %v228, 4294901760
        %v346 = vsub.f32 %v228, %v345
        %v347 = vand.u32 %v346, 4294901760
        %v348 = vsub.f32 %v346, %v347
        %v349 = vand.u32 %v348, 4294901760
        %350 = vmatpush1.msra.mxu0 %v349
        %351 = vmatprep.subr.mxu0 0.0
        %v352 = vand.u32 %v227, 4294901760
        %v353 = vsub.f32 %v227, %v352
        %v354 = vand.u32 %v353, 4294901760
        %v355 = vsub.f32 %v353, %v354
        %v356 = vand.u32 %v355, 4294901760
        %357 = vmatpush1.msra.mxu0 %v356
        %358 = vmatprep.subr.mxu0 0.0
        %v359 = vand.u32 %v226, 4294901760
        %v360 = vsub.f32 %v226, %v359
        %v361 = vand.u32 %v360, 4294901760
        %v362 = vsub.f32 %v360, %v361
        %v363 = vand.u32 %v362, 4294901760
        %364 = vmatpush1.msra.mxu0 %v363
        %365 = vmatprep.subr.mxu0 0.0
        %v366 = vand.u32 %v225, 4294901760
        %v367 = vsub.f32 %v225, %v366
        %v368 = vand.u32 %v367, 4294901760
        %v369 = vsub.f32 %v367, %v368
        %v370 = vand.u32 %v369, 4294901760
        %371 = vmatpush1.msra.mxu0 %v370
        %372 = vmatprep.subr.mxu0 0.0
        %v373 = vand.u32 %v224, 4294901760
        %v374 = vsub.f32 %v224, %v373
        %v375 = vand.u32 %v374, 4294901760
        %v376 = vsub.f32 %v374, %v375
        %v377 = vand.u32 %v376, 4294901760
        %378 = vmatpush1.msra.mxu0 %v377
        %379 = vmatprep.subr.mxu0 0.0
        %v380 = vand.u32 %v223, 4294901760
        %v381 = vsub.f32 %v223, %v380
        %v382 = vand.u32 %v381, 4294901760
        %v383 = vsub.f32 %v381, %v382
        %v384 = vand.u32 %v383, 4294901760
        %385 = vmatpush1.msra.mxu0 %v384
        %386 = vmatprep.subr.mxu0 0.0
        %v387 = vand.u32 %v222, 4294901760
        %v388 = vsub.f32 %v222, %v387
        %v389 = vand.u32 %v388, 4294901760
        %v390 = vsub.f32 %v388, %v389
        %v391 = vand.u32 %v390, 4294901760
        %392 = vmatpush1.msra.mxu0 %v391
        %393 = vmatprep.subr.mxu0 0.0
        %394 = vmatpush2.msra.mxu0 0.0
        %395 = vmatprep.subr.mxu0 0.0
        %396 = vmatpush2.msra.mxu0 0.0
        %397 = vmatprep.subr.mxu0 0.0
        %398 = vmatpush2.msra.mxu0 0.0
        %399 = vmatprep.subr.mxu0 0.0
        %400 = vmatpush2.msra.mxu0 0.0
        %401 = vmatprep.subr.mxu0 0.0
        %402 = vmatpush2.msra.mxu0 0.0
        %403 = vmatprep.subr.mxu0 0.0
        %404 = vmatpush2.msra.mxu0 0.0
        %405 = vmatprep.subr.mxu0 0.0
        %406 = vmatpush2.msra.mxu0 0.0
        %407 = vmatprep.subr.mxu0 0.0
        %408 = vmatpush2.msra.mxu0 0.0
        %409 = vmatprep.subr.mxu0 0.0
        %410 = vmatpush2.msra.mxu0 0.0
        %411 = vmatprep.subr.mxu0 0.0
        %412 = vmatpush2.msra.mxu0 0.0
        %413 = vmatprep.subr.mxu0 0.0
        %414 = vmatpush2.msra.mxu0 0.0
        %415 = vmatprep.subr.mxu0 0.0
        %416 = vmatpush2.msra.mxu0 0.0
        %417 = vmatprep.subr.mxu0 0.0
        %418 = vmatpush2.msra.mxu0 0.0
        %419 = vmatprep.subr.mxu0 0.0
        %420 = vmatpush2.msra.mxu0 0.0
        %421 = vmatprep.subr.mxu0 0.0
        %422 = vmatpush2.msra.mxu0 0.0
        %423 = vmatprep.subr.mxu0 0.0
        %424 = vmatpush2.msra.mxu0 0.0
        %425 = vmatprep.mubr.f32.mxu0 0.0
        %v426 = vand.u32 %v236, 4294901760
        %427 = vmatmul.mubr.f32.gmra.mxu0 %v426
        %v428 = vpop.f32.mrf.mxu0
        %v429 = vadd.f32 %v318, %v428
        %v430 = vpop.f32.mrf.mxu0
        %431 = vdwg.mxu0
        %432 = vmatprep.subr.mxu0 0.0
        %433 = vmatpush1.msra.mxu0 0.0
        %434 = vmatprep.subr.mxu0 0.0
        %435 = vmatpush1.msra.mxu0 0.0
        %436 = vmatprep.subr.mxu0 0.0
        %437 = vmatpush1.msra.mxu0 0.0
        %438 = vmatprep.subr.mxu0 0.0
        %439 = vmatpush1.msra.mxu0 0.0
        %440 = vmatprep.subr.mxu0 0.0
        %441 = vmatpush1.msra.mxu0 0.0
        %442 = vmatprep.subr.mxu0 0.0
        %443 = vmatpush1.msra.mxu0 0.0
        %444 = vmatprep.subr.mxu0 0.0
        %445 = vmatpush1.msra.mxu0 0.0
        %446 = vmatprep.subr.mxu0 0.0
        %447 = vmatpush1.msra.mxu0 0.0
        %448 = vmatprep.subr.mxu0 0.0
        %v449 = vand.u32 %v229, 4294901760
        %v450 = vsub.f32 %v229, %v449
        %451 = vmatpush1.msra.mxu0 %v450
        %452 = vmatprep.subr.mxu0 0.0
        %v453 = vand.u32 %v228, 4294901760
        %v454 = vsub.f32 %v228, %v453
        %455 = vmatpush1.msra.mxu0 %v454
        %456 = vmatprep.subr.mxu0 0.0
        %v457 = vand.u32 %v227, 4294901760
        %v458 = vsub.f32 %v227, %v457
        %459 = vmatpush1.msra.mxu0 %v458
        %460 = vmatprep.subr.mxu0 0.0
        %v461 = vand.u32 %v226, 4294901760
        %v462 = vsub.f32 %v226, %v461
        %463 = vmatpush1.msra.mxu0 %v462
        %464 = vmatprep.subr.mxu0 0.0
        %v465 = vand.u32 %v225, 4294901760
        %v466 = vsub.f32 %v225, %v465
        %467 = vmatpush1.msra.mxu0 %v466
        %468 = vmatprep.subr.mxu0 0.0
        %v469 = vand.u32 %v224, 4294901760
        %v470 = vsub.f32 %v224, %v469
        %471 = vmatpush1.msra.mxu0 %v470
        %472 = vmatprep.subr.mxu0 0.0
        %v473 = vand.u32 %v223, 4294901760
        %v474 = vsub.f32 %v223, %v473
        %475 = vmatpush1.msra.mxu0 %v474
        %476 = vmatprep.subr.mxu0 0.0
        %v477 = vand.u32 %v222, 4294901760
        %v478 = vsub.f32 %v222, %v477
        %479 = vmatpush1.msra.mxu0 %v478
        %480 = vmatprep.subr.mxu0 0.0
        %481 = vmatpush2.msra.mxu0 0.0
        %482 = vmatprep.subr.mxu0 0.0
        %483 = vmatpush2.msra.mxu0 0.0
        %484 = vmatprep.subr.mxu0 0.0
        %485 = vmatpush2.msra.mxu0 0.0
        %486 = vmatprep.subr.mxu0 0.0
        %487 = vmatpush2.msra.mxu0 0.0
        %488 = vmatprep.subr.mxu0 0.0
        %489 = vmatpush2.msra.mxu0 0.0
        %490 = vmatprep.subr.mxu0 0.0
        %491 = vmatpush2.msra.mxu0 0.0
        %492 = vmatprep.subr.mxu0 0.0
        %493 = vmatpush2.msra.mxu0 0.0
        %494 = vmatprep.subr.mxu0 0.0
        %495 = vmatpush2.msra.mxu0 0.0
        %496 = vmatprep.subr.mxu0 0.0
        %497 = vmatpush2.msra.mxu0 0.0
        %498 = vmatprep.subr.mxu0 0.0
        %499 = vmatpush2.msra.mxu0 0.0
        %500 = vmatprep.subr.mxu0 0.0
        %501 = vmatpush2.msra.mxu0 0.0
        %502 = vmatprep.subr.mxu0 0.0
        %503 = vmatpush2.msra.mxu0 0.0
        %504 = vmatprep.subr.mxu0 0.0
        %505 = vmatpush2.msra.mxu0 0.0
        %506 = vmatprep.subr.mxu0 0.0
        %507 = vmatpush2.msra.mxu0 0.0
        %508 = vmatprep.subr.mxu0 0.0
        %509 = vmatpush2.msra.mxu0 0.0
        %510 = vmatprep.subr.mxu0 0.0
        %511 = vmatpush2.msra.mxu0 0.0
        %512 = vmatprep.mubr.f32.mxu0 0.0
        %v513 = vand.u32 %v236, 4294901760
        %v514 = vsub.f32 %v236, %v513
        %515 = vmatmul.mubr.f32.gmra.mxu0 %v514
        %v516 = vpop.f32.mrf.mxu0
        %v517 = vadd.f32 %v429, %v516
        %v518 = vpop.f32.mrf.mxu0
        %519 = vdwg.mxu0
        %520 = vmatprep.subr.mxu0 0.0
        %521 = vmatpush1.msra.mxu0 0.0
        %522 = vmatprep.subr.mxu0 0.0
        %523 = vmatpush1.msra.mxu0 0.0
        %524 = vmatprep.subr.mxu0 0.0
        %525 = vmatpush1.msra.mxu0 0.0
        %526 = vmatprep.subr.mxu0 0.0
        %527 = vmatpush1.msra.mxu0 0.0
        %528 = vmatprep.subr.mxu0 0.0
        %529 = vmatpush1.msra.mxu0 0.0
        %530 = vmatprep.subr.mxu0 0.0
        %531 = vmatpush1.msra.mxu0 0.0
        %532 = vmatprep.subr.mxu0 0.0
        %533 = vmatpush1.msra.mxu0 0.0
        %534 = vmatprep.subr.mxu0 0.0
        %535 = vmatpush1.msra.mxu0 0.0
        %536 = vmatprep.subr.mxu0 0.0
        %v537 = vand.u32 %v229, 4294901760
        %538 = vmatpush1.msra.mxu0 %v537
        %539 = vmatprep.subr.mxu0 0.0
        %v540 = vand.u32 %v228, 4294901760
        %541 = vmatpush1.msra.mxu0 %v540
        %542 = vmatprep.subr.mxu0 0.0
        %v543 = vand.u32 %v227, 4294901760
        %544 = vmatpush1.msra.mxu0 %v543
        %545 = vmatprep.subr.mxu0 0.0
        %v546 = vand.u32 %v226, 4294901760
        %547 = vmatpush1.msra.mxu0 %v546
        %548 = vmatprep.subr.mxu0 0.0
        %v549 = vand.u32 %v225, 4294901760
        %550 = vmatpush1.msra.mxu0 %v549
        %551 = vmatprep.subr.mxu0 0.0
        %v552 = vand.u32 %v224, 4294901760
        %553 = vmatpush1.msra.mxu0 %v552
        %554 = vmatprep.subr.mxu0 0.0
        %v555 = vand.u32 %v223, 4294901760
        %556 = vmatpush1.msra.mxu0 %v555
        %557 = vmatprep.subr.mxu0 0.0
        %v558 = vand.u32 %v222, 4294901760
        %559 = vmatpush1.msra.mxu0 %v558
        %560 = vmatprep.subr.mxu0 0.0
        %561 = vmatpush2.msra.mxu0 0.0
        %562 = vmatprep.subr.mxu0 0.0
        %563 = vmatpush2.msra.mxu0 0.0
        %564 = vmatprep.subr.mxu0 0.0
        %565 = vmatpush2.msra.mxu0 0.0
        %566 = vmatprep.subr.mxu0 0.0
        %567 = vmatpush2.msra.mxu0 0.0
        %568 = vmatprep.subr.mxu0 0.0
        %569 = vmatpush2.msra.mxu0 0.0
        %570 = vmatprep.subr.mxu0 0.0
        %571 = vmatpush2.msra.mxu0 0.0
        %572 = vmatprep.subr.mxu0 0.0
        %573 = vmatpush2.msra.mxu0 0.0
        %574 = vmatprep.subr.mxu0 0.0
        %575 = vmatpush2.msra.mxu0 0.0
        %576 = vmatprep.subr.mxu0 0.0
        %577 = vmatpush2.msra.mxu0 0.0
        %578 = vmatprep.subr.mxu0 0.0
        %579 = vmatpush2.msra.mxu0 0.0
        %580 = vmatprep.subr.mxu0 0.0
        %581 = vmatpush2.msra.mxu0 0.0
        %582 = vmatprep.subr.mxu0 0.0
        %583 = vmatpush2.msra.mxu0 0.0
        %584 = vmatprep.subr.mxu0 0.0
        %585 = vmatpush2.msra.mxu0 0.0
        %586 = vmatprep.subr.mxu0 0.0
        %587 = vmatpush2.msra.mxu0 0.0
        %588 = vmatprep.subr.mxu0 0.0
        %589 = vmatpush2.msra.mxu0 0.0
        %590 = vmatprep.subr.mxu0 0.0
        %591 = vmatpush2.msra.mxu0 0.0
        %592 = vmatprep.mubr.f32.mxu0 0.0
        %v593 = vand.u32 %v236, 4294901760
        %v594 = vsub.f32 %v236, %v593
        %v595 = vand.u32 %v594, 4294901760
        %596 = vmatmul.mubr.f32.gmra.mxu0 %v595
        %v597 = vpop.f32.mrf.mxu0
        %v598 = vadd.f32 %v517, %v597
        %v599 = vpop.f32.mrf.mxu0
        %600 = vdwg.mxu0
        %601 = vmatprep.subr.mxu0 0.0
        %602 = vmatpush1.msra.mxu0 0.0
        %603 = vmatprep.subr.mxu0 0.0
        %604 = vmatpush1.msra.mxu0 0.0
        %605 = vmatprep.subr.mxu0 0.0
        %606 = vmatpush1.msra.mxu0 0.0
        %607 = vmatprep.subr.mxu0 0.0
        %608 = vmatpush1.msra.mxu0 0.0
        %609 = vmatprep.subr.mxu0 0.0
        %610 = vmatpush1.msra.mxu0 0.0
        %611 = vmatprep.subr.mxu0 0.0
        %612 = vmatpush1.msra.mxu0 0.0
        %613 = vmatprep.subr.mxu0 0.0
        %614 = vmatpush1.msra.mxu0 0.0
        %615 = vmatprep.subr.mxu0 0.0
        %616 = vmatpush1.msra.mxu0 0.0
        %617 = vmatprep.subr.mxu0 0.0
        %v618 = vand.u32 %v229, 4294901760
        %v619 = vsub.f32 %v229, %v618
        %v620 = vand.u32 %v619, 4294901760
        %621 = vmatpush1.msra.mxu0 %v620
        %622 = vmatprep.subr.mxu0 0.0
        %v623 = vand.u32 %v228, 4294901760
        %v624 = vsub.f32 %v228, %v623
        %v625 = vand.u32 %v624, 4294901760
        %626 = vmatpush1.msra.mxu0 %v625
        %627 = vmatprep.subr.mxu0 0.0
        %v628 = vand.u32 %v227, 4294901760
        %v629 = vsub.f32 %v227, %v628
        %v630 = vand.u32 %v629, 4294901760
        %631 = vmatpush1.msra.mxu0 %v630
        %632 = vmatprep.subr.mxu0 0.0
        %v633 = vand.u32 %v226, 4294901760
        %v634 = vsub.f32 %v226, %v633
        %v635 = vand.u32 %v634, 4294901760
        %636 = vmatpush1.msra.mxu0 %v635
        %637 = vmatprep.subr.mxu0 0.0
        %v638 = vand.u32 %v225, 4294901760
        %v639 = vsub.f32 %v225, %v638
        %v640 = vand.u32 %v639, 4294901760
        %641 = vmatpush1.msra.mxu0 %v640
        %642 = vmatprep.subr.mxu0 0.0
        %v643 = vand.u32 %v224, 4294901760
        %v644 = vsub.f32 %v224, %v643
        %v645 = vand.u32 %v644, 4294901760
        %646 = vmatpush1.msra.mxu0 %v645
        %647 = vmatprep.subr.mxu0 0.0
        %v648 = vand.u32 %v223, 4294901760
        %v649 = vsub.f32 %v223, %v648
        %v650 = vand.u32 %v649, 4294901760
        %651 = vmatpush1.msra.mxu0 %v650
        %652 = vmatprep.subr.mxu0 0.0
        %v653 = vand.u32 %v222, 4294901760
        %v654 = vsub.f32 %v222, %v653
        %v655 = vand.u32 %v654, 4294901760
        %656 = vmatpush1.msra.mxu0 %v655
        %657 = vmatprep.subr.mxu0 0.0
        %658 = vmatpush2.msra.mxu0 0.0
        %659 = vmatprep.subr.mxu0 0.0
        %660 = vmatpush2.msra.mxu0 0.0
        %661 = vmatprep.subr.mxu0 0.0
        %662 = vmatpush2.msra.mxu0 0.0
        %663 = vmatprep.subr.mxu0 0.0
        %664 = vmatpush2.msra.mxu0 0.0
        %665 = vmatprep.subr.mxu0 0.0
        %666 = vmatpush2.msra.mxu0 0.0
        %667 = vmatprep.subr.mxu0 0.0
        %668 = vmatpush2.msra.mxu0 0.0
        %669 = vmatprep.subr.mxu0 0.0
        %670 = vmatpush2.msra.mxu0 0.0
        %671 = vmatprep.subr.mxu0 0.0
        %672 = vmatpush2.msra.mxu0 0.0
        %673 = vmatprep.subr.mxu0 0.0
        %674 = vmatpush2.msra.mxu0 0.0
        %675 = vmatprep.subr.mxu0 0.0
        %676 = vmatpush2.msra.mxu0 0.0
        %677 = vmatprep.subr.mxu0 0.0
        %678 = vmatpush2.msra.mxu0 0.0
        %679 = vmatprep.subr.mxu0 0.0
        %680 = vmatpush2.msra.mxu0 0.0
        %681 = vmatprep.subr.mxu0 0.0
        %682 = vmatpush2.msra.mxu0 0.0
        %683 = vmatprep.subr.mxu0 0.0
        %684 = vmatpush2.msra.mxu0 0.0
        %685 = vmatprep.subr.mxu0 0.0
        %686 = vmatpush2.msra.mxu0 0.0
        %687 = vmatprep.subr.mxu0 0.0
        %688 = vmatpush2.msra.mxu0 0.0
        %689 = vmatprep.mubr.f32.mxu0 0.0
        %v690 = vand.u32 %v236, 4294901760
        %691 = vmatmul.mubr.f32.gmra.mxu0 %v690
        %v692 = vpop.f32.mrf.mxu0
        %v693 = vadd.f32 %v598, %v692
        %v694 = vpop.f32.mrf.mxu0
        %695 = vdwg.mxu0
        %696 = vmatprep.subr.mxu0 0.0
        %697 = vmatpush1.msra.mxu0 0.0
        %698 = vmatprep.subr.mxu0 0.0
        %699 = vmatpush1.msra.mxu0 0.0
        %700 = vmatprep.subr.mxu0 0.0
        %701 = vmatpush1.msra.mxu0 0.0
        %702 = vmatprep.subr.mxu0 0.0
        %703 = vmatpush1.msra.mxu0 0.0
        %704 = vmatprep.subr.mxu0 0.0
        %705 = vmatpush1.msra.mxu0 0.0
        %706 = vmatprep.subr.mxu0 0.0
        %707 = vmatpush1.msra.mxu0 0.0
        %708 = vmatprep.subr.mxu0 0.0
        %709 = vmatpush1.msra.mxu0 0.0
        %710 = vmatprep.subr.mxu0 0.0
        %711 = vmatpush1.msra.mxu0 0.0
        %712 = vmatprep.subr.mxu0 0.0
        %v713 = vand.u32 %v229, 4294901760
        %714 = vmatpush1.msra.mxu0 %v713
        %715 = vmatprep.subr.mxu0 0.0
        %v716 = vand.u32 %v228, 4294901760
        %717 = vmatpush1.msra.mxu0 %v716
        %718 = vmatprep.subr.mxu0 0.0
        %v719 = vand.u32 %v227, 4294901760
        %720 = vmatpush1.msra.mxu0 %v719
        %721 = vmatprep.subr.mxu0 0.0
        %v722 = vand.u32 %v226, 4294901760
        %723 = vmatpush1.msra.mxu0 %v722
        %724 = vmatprep.subr.mxu0 0.0
        %v725 = vand.u32 %v225, 4294901760
        %726 = vmatpush1.msra.mxu0 %v725
        %727 = vmatprep.subr.mxu0 0.0
        %v728 = vand.u32 %v224, 4294901760
        %729 = vmatpush1.msra.mxu0 %v728
        %730 = vmatprep.subr.mxu0 0.0
        %v731 = vand.u32 %v223, 4294901760
        %732 = vmatpush1.msra.mxu0 %v731
        %733 = vmatprep.subr.mxu0 0.0
        %v734 = vand.u32 %v222, 4294901760
        %735 = vmatpush1.msra.mxu0 %v734
        %736 = vmatprep.subr.mxu0 0.0
        %737 = vmatpush2.msra.mxu0 0.0
        %738 = vmatprep.subr.mxu0 0.0
        %739 = vmatpush2.msra.mxu0 0.0
        %740 = vmatprep.subr.mxu0 0.0
        %741 = vmatpush2.msra.mxu0 0.0
        %742 = vmatprep.subr.mxu0 0.0
        %743 = vmatpush2.msra.mxu0 0.0
        %744 = vmatprep.subr.mxu0 0.0
        %745 = vmatpush2.msra.mxu0 0.0
        %746 = vmatprep.subr.mxu0 0.0
        %747 = vmatpush2.msra.mxu0 0.0
        %748 = vmatprep.subr.mxu0 0.0
        %749 = vmatpush2.msra.mxu0 0.0
        %750 = vmatprep.subr.mxu0 0.0
        %751 = vmatpush2.msra.mxu0 0.0
        %752 = vmatprep.subr.mxu0 0.0
        %753 = vmatpush2.msra.mxu0 0.0
        %754 = vmatprep.subr.mxu0 0.0
        %755 = vmatpush2.msra.mxu0 0.0
        %756 = vmatprep.subr.mxu0 0.0
        %757 = vmatpush2.msra.mxu0 0.0
        %758 = vmatprep.subr.mxu0 0.0
        %759 = vmatpush2.msra.mxu0 0.0
        %760 = vmatprep.subr.mxu0 0.0
        %761 = vmatpush2.msra.mxu0 0.0
        %762 = vmatprep.subr.mxu0 0.0
        %763 = vmatpush2.msra.mxu0 0.0
        %764 = vmatprep.subr.mxu0 0.0
        %765 = vmatpush2.msra.mxu0 0.0
        %766 = vmatprep.subr.mxu0 0.0
        %767 = vmatpush2.msra.mxu0 0.0
        %768 = vmatprep.mubr.f32.mxu0 0.0
        %v769 = vand.u32 %v236, 4294901760
        %770 = vmatmul.mubr.f32.gmra.mxu0 %v769
        %v771 = vpop.f32.mrf.mxu0
        %v772 = vadd.f32 %v693, %v771
        %v773 = vpop.f32.mrf.mxu0
        %774 = vdwg.mxu0
        %775 = vadd.xlane.f32.xlu0 %v772
        %v776 = vpop.xlane.xlu0 %775
        %v777 = vrcp.pop 128.0
        %v778 = vmul.f32 %v776, %v777
        %v779 = vsub.f32 %v772, %v778
        %v780 = vmul.f32 %v779, %v779
        %781 = vadd.xlane.f32.xlu0 %v780
        %v782 = vpop.xlane.xlu0 %781
        %v783 = vmul.f32 %v782, %v777
        %v784 = vadd.f32 %v783, 1e-05
        %v785 = vrsqrt.pop %v784
        %v786 = vmul.f32 %v779, %v785
        %v787 = vlaneseq
        %v788 = vshrl.u32 %v787, 7
        %v789 = vsub.s32 1, %v788
        %v790 = vrot.slane %v221, %v789
        %v791 = vmul.f32 %v786, %v790
        %v792 = vlaneseq
        %v793 = vshrl.u32 %v792, 7
        %v794 = vsub.s32 2, %v793
        %v795 = vrot.slane %v221, %v794
        %v796 = vadd.f32 %v791, %v795
        %vm797 = vcmp.ge.f32.partialorder %v796, 0.0
        %v798 = vmul.f32 %v796, 0.01
        %v799 = vsel %vm797, %v796, %v798
        %v800 = vld [vmem:[%s4] sm:$0x7]
        %v801 = vld [vmem:[%s3] sm:$0xff]
        %v802 = vld [vmem:[%s3 + $0x8] sm:$0xff]
        %v803 = vld [vmem:[%s3 + $0x10] sm:$0xff]
        %v804 = vld [vmem:[%s3 + $0x18] sm:$0xff]
        %v805 = vld [vmem:[%s3 + $0x20] sm:$0xff]
        %v806 = vld [vmem:[%s3 + $0x28] sm:$0xff]
        %v807 = vld [vmem:[%s3 + $0x30] sm:$0xff]
        %v808 = vld [vmem:[%s3 + $0x38] sm:$0xff]
        %v809 = vld [vmem:[%s3 + $0x40] sm:$0xff]
        %v810 = vld [vmem:[%s3 + $0x48] sm:$0xff]
        %v811 = vld [vmem:[%s3 + $0x50] sm:$0xff]
        %v812 = vld [vmem:[%s3 + $0x58] sm:$0xff]
        %v813 = vld [vmem:[%s3 + $0x60] sm:$0xff]
        %v814 = vld [vmem:[%s3 + $0x68] sm:$0xff]
        %v815 = vld [vmem:[%s3 + $0x70] sm:$0xff]
        %v816 = vld [vmem:[%s3 + $0x78] sm:$0xff]
        %v817 = vlaneseq
        %v818 = vshrl.u32 %v817, 7
        %v819 = vsub.s32 0, %v818
        %v820 = vrot.slane %v800, %v819
        %821 = vmatprep.subr.mxu0 0.0
        %v822 = vand.u32 %v816, 4294901760
        %823 = vmatpush1.msra.mxu0 %v822
        %824 = vmatprep.subr.mxu0 0.0
        %v825 = vand.u32 %v815, 4294901760
        %826 = vmatpush1.msra.mxu0 %v825
        %827 = vmatprep.subr.mxu0 0.0
        %v828 = vand.u32 %v814, 4294901760
        %829 = vmatpush1.msra.mxu0 %v828
        %830 = vmatprep.subr.mxu0 0.0
        %v831 = vand.u32 %v813, 4294901760
        %832 = vmatpush1.msra.mxu0 %v831
        %833 = vmatprep.subr.mxu0 0.0
        %v834 = vand.u32 %v812, 4294901760
        %835 = vmatpush1.msra.mxu0 %v834
        %836 = vmatprep.subr.mxu0 0.0
        %v837 = vand.u32 %v811, 4294901760
        %838 = vmatpush1.msra.mxu0 %v837
        %839 = vmatprep.subr.mxu0 0.0
        %v840 = vand.u32 %v810, 4294901760
        %841 = vmatpush1.msra.mxu0 %v840
        %842 = vmatprep.subr.mxu0 0.0
        %v843 = vand.u32 %v809, 4294901760
        %844 = vmatpush1.msra.mxu0 %v843
        %845 = vmatprep.subr.mxu0 0.0
        %v846 = vand.u32 %v808, 4294901760
        %847 = vmatpush1.msra.mxu0 %v846
        %848 = vmatprep.subr.mxu0 0.0
        %v849 = vand.u32 %v807, 4294901760
        %850 = vmatpush1.msra.mxu0 %v849
        %851 = vmatprep.subr.mxu0 0.0
        %v852 = vand.u32 %v806, 4294901760
        %853 = vmatpush1.msra.mxu0 %v852
        %854 = vmatprep.subr.mxu0 0.0
        %v855 = vand.u32 %v805, 4294901760
        %856 = vmatpush1.msra.mxu0 %v855
        %857 = vmatprep.subr.mxu0 0.0
        %v858 = vand.u32 %v804, 4294901760
        %859 = vmatpush1.msra.mxu0 %v858
        %860 = vmatprep.subr.mxu0 0.0
        %v861 = vand.u32 %v803, 4294901760
        %862 = vmatpush1.msra.mxu0 %v861
        %863 = vmatprep.subr.mxu0 0.0
        %v864 = vand.u32 %v802, 4294901760
        %865 = vmatpush1.msra.mxu0 %v864
        %866 = vmatprep.subr.mxu0 0.0
        %v867 = vand.u32 %v801, 4294901760
        %868 = vmatpush1.msra.mxu0 %v867
        %869 = vmatprep.subr.mxu0 0.0
        %870 = vmatpush2.msra.mxu0 0.0
        %871 = vmatprep.subr.mxu0 0.0
        %872 = vmatpush2.msra.mxu0 0.0
        %873 = vmatprep.subr.mxu0 0.0
        %874 = vmatpush2.msra.mxu0 0.0
        %875 = vmatprep.subr.mxu0 0.0
        %876 = vmatpush2.msra.mxu0 0.0
        %877 = vmatprep.subr.mxu0 0.0
        %878 = vmatpush2.msra.mxu0 0.0
        %879 = vmatprep.subr.mxu0 0.0
        %880 = vmatpush2.msra.mxu0 0.0
        %881 = vmatprep.subr.mxu0 0.0
        %882 = vmatpush2.msra.mxu0 0.0
        %883 = vmatprep.subr.mxu0 0.0
        %884 = vmatpush2.msra.mxu0 0.0
        %885 = vmatprep.subr.mxu0 0.0
        %886 = vmatpush2.msra.mxu0 0.0
        %887 = vmatprep.subr.mxu0 0.0
        %888 = vmatpush2.msra.mxu0 0.0
        %889 = vmatprep.subr.mxu0 0.0
        %890 = vmatpush2.msra.mxu0 0.0
        %891 = vmatprep.subr.mxu0 0.0
        %892 = vmatpush2.msra.mxu0 0.0
        %893 = vmatprep.subr.mxu0 0.0
        %894 = vmatpush2.msra.mxu0 0.0
        %895 = vmatprep.subr.mxu0 0.0
        %896 = vmatpush2.msra.mxu0 0.0
        %897 = vmatprep.subr.mxu0 0.0
        %898 = vmatpush2.msra.mxu0 0.0
        %899 = vmatprep.subr.mxu0 0.0
        %900 = vmatpush2.msra.mxu0 0.0
        %901 = vmatprep.mubr.f32.mxu0 0.0
        %v902 = vand.u32 %v799, 4294901760
        %v903 = vsub.f32 %v799, %v902
        %v904 = vand.u32 %v903, 4294901760
        %v905 = vsub.f32 %v903, %v904
        %v906 = vand.u32 %v905, 4294901760
        %907 = vmatmul.mubr.f32.gmra.mxu0 %v906
        %v908 = vpop.f32.mrf.mxu0
        %v909 = vadd.f32 %v820, %v908
        %v910 = vpop.f32.mrf.mxu0
        %911 = vdwg.mxu0
        %912 = vmatprep.subr.mxu0 0.0
        %v913 = vand.u32 %v816, 4294901760
        %v914 = vsub.f32 %v816, %v913
        %v915 = vand.u32 %v914, 4294901760
        %v916 = vsub.f32 %v914, %v915
        %v917 = vand.u32 %v916, 4294901760
        %918 = vmatpush1.msra.mxu0 %v917
        %919 = vmatprep.subr.mxu0 0.0
        %v920 = vand.u32 %v815, 4294901760
        %v921 = vsub.f32 %v815, %v920
        %v922 = vand.u32 %v921, 4294901760
        %v923 = vsub.f32 %v921, %v922
        %v924 = vand.u32 %v923, 4294901760
        %925 = vmatpush1.msra.mxu0 %v924
        %926 = vmatprep.subr.mxu0 0.0
        %v927 = vand.u32 %v814, 4294901760
        %v928 = vsub.f32 %v814, %v927
        %v929 = vand.u32 %v928, 4294901760
        %v930 = vsub.f32 %v928, %v929
        %v931 = vand.u32 %v930, 4294901760
        %932 = vmatpush1.msra.mxu0 %v931
        %933 = vmatprep.subr.mxu0 0.0
        %v934 = vand.u32 %v813, 4294901760
        %v935 = vsub.f32 %v813, %v934
        %v936 = vand.u32 %v935, 4294901760
        %v937 = vsub.f32 %v935, %v936
        %v938 = vand.u32 %v937, 4294901760
        %939 = vmatpush1.msra.mxu0 %v938
        %940 = vmatprep.subr.mxu0 0.0
        %v941 = vand.u32 %v812, 4294901760
        %v942 = vsub.f32 %v812, %v941
        %v943 = vand.u32 %v942, 4294901760
        %v944 = vsub.f32 %v942, %v943
        %v945 = vand.u32 %v944, 4294901760
        %946 = vmatpush1.msra.mxu0 %v945
        %947 = vmatprep.subr.mxu0 0.0
        %v948 = vand.u32 %v811, 4294901760
        %v949 = vsub.f32 %v811, %v948
        %v950 = vand.u32 %v949, 4294901760
        %v951 = vsub.f32 %v949, %v950
        %v952 = vand.u32 %v951, 4294901760
        %953 = vmatpush1.msra.mxu0 %v952
        %954 = vmatprep.subr.mxu0 0.0
        %v955 = vand.u32 %v810, 4294901760
        %v956 = vsub.f32 %v810, %v955
        %v957 = vand.u32 %v956, 4294901760
        %v958 = vsub.f32 %v956, %v957
        %v959 = vand.u32 %v958, 4294901760
        %960 = vmatpush1.msra.mxu0 %v959
        %961 = vmatprep.subr.mxu0 0.0
        %v962 = vand.u32 %v809, 4294901760
        %v963 = vsub.f32 %v809, %v962
        %v964 = vand.u32 %v963, 4294901760
        %v965 = vsub.f32 %v963, %v964
        %v966 = vand.u32 %v965, 4294901760
        %967 = vmatpush1.msra.mxu0 %v966
        %968 = vmatprep.subr.mxu0 0.0
        %v969 = vand.u32 %v808, 4294901760
        %v970 = vsub.f32 %v808, %v969
        %v971 = vand.u32 %v970, 4294901760
        %v972 = vsub.f32 %v970, %v971
        %v973 = vand.u32 %v972, 4294901760
        %974 = vmatpush1.msra.mxu0 %v973
        %975 = vmatprep.subr.mxu0 0.0
        %v976 = vand.u32 %v807, 4294901760
        %v977 = vsub.f32 %v807, %v976
        %v978 = vand.u32 %v977, 4294901760
        %v979 = vsub.f32 %v977, %v978
        %v980 = vand.u32 %v979, 4294901760
        %981 = vmatpush1.msra.mxu0 %v980
        %982 = vmatprep.subr.mxu0 0.0
        %v983 = vand.u32 %v806, 4294901760
        %v984 = vsub.f32 %v806, %v983
        %v985 = vand.u32 %v984, 4294901760
        %v986 = vsub.f32 %v984, %v985
        %v987 = vand.u32 %v986, 4294901760
        %988 = vmatpush1.msra.mxu0 %v987
        %989 = vmatprep.subr.mxu0 0.0
        %v990 = vand.u32 %v805, 4294901760
        %v991 = vsub.f32 %v805, %v990
        %v992 = vand.u32 %v991, 4294901760
        %v993 = vsub.f32 %v991, %v992
        %v994 = vand.u32 %v993, 4294901760
        %995 = vmatpush1.msra.mxu0 %v994
        %996 = vmatprep.subr.mxu0 0.0
        %v997 = vand.u32 %v804, 4294901760
        %v998 = vsub.f32 %v804, %v997
        %v999 = vand.u32 %v998, 4294901760
        %v1000 = vsub.f32 %v998, %v999
        %v1001 = vand.u32 %v1000, 4294901760
        %1002 = vmatpush1.msra.mxu0 %v1001
        %1003 = vmatprep.subr.mxu0 0.0
        %v1004 = vand.u32 %v803, 4294901760
        %v1005 = vsub.f32 %v803, %v1004
        %v1006 = vand.u32 %v1005, 4294901760
        %v1007 = vsub.f32 %v1005, %v1006
        %v1008 = vand.u32 %v1007, 4294901760
        %1009 = vmatpush1.msra.mxu0 %v1008
        %1010 = vmatprep.subr.mxu0 0.0
        %v1011 = vand.u32 %v802, 4294901760
        %v1012 = vsub.f32 %v802, %v1011
        %v1013 = vand.u32 %v1012, 4294901760
        %v1014 = vsub.f32 %v1012, %v1013
        %v1015 = vand.u32 %v1014, 4294901760
        %1016 = vmatpush1.msra.mxu0 %v1015
        %1017 = vmatprep.subr.mxu0 0.0
        %v1018 = vand.u32 %v801, 4294901760
        %v1019 = vsub.f32 %v801, %v1018
        %v1020 = vand.u32 %v1019, 4294901760
        %v1021 = vsub.f32 %v1019, %v1020
        %v1022 = vand.u32 %v1021, 4294901760
        %1023 = vmatpush1.msra.mxu0 %v1022
        %1024 = vmatprep.subr.mxu0 0.0
        %1025 = vmatpush2.msra.mxu0 0.0
        %1026 = vmatprep.subr.mxu0 0.0
        %1027 = vmatpush2.msra.mxu0 0.0
        %1028 = vmatprep.subr.mxu0 0.0
        %1029 = vmatpush2.msra.mxu0 0.0
        %1030 = vmatprep.subr.mxu0 0.0
        %1031 = vmatpush2.msra.mxu0 0.0
        %1032 = vmatprep.subr.mxu0 0.0
        %1033 = vmatpush2.msra.mxu0 0.0
        %1034 = vmatprep.subr.mxu0 0.0
        %1035 = vmatpush2.msra.mxu0 0.0
        %1036 = vmatprep.subr.mxu0 0.0
        %1037 = vmatpush2.msra.mxu0 0.0
        %1038 = vmatprep.subr.mxu0 0.0
        %1039 = vmatpush2.msra.mxu0 0.0
        %1040 = vmatprep.subr.mxu0 0.0
        %1041 = vmatpush2.msra.mxu0 0.0
        %1042 = vmatprep.subr.mxu0 0.0
        %1043 = vmatpush2.msra.mxu0 0.0
        %1044 = vmatprep.subr.mxu0 0.0
        %1045 = vmatpush2.msra.mxu0 0.0
        %1046 = vmatprep.subr.mxu0 0.0
        %1047 = vmatpush2.msra.mxu0 0.0
        %1048 = vmatprep.subr.mxu0 0.0
        %1049 = vmatpush2.msra.mxu0 0.0
        %1050 = vmatprep.subr.mxu0 0.0
        %1051 = vmatpush2.msra.mxu0 0.0
        %1052 = vmatprep.subr.mxu0 0.0
        %1053 = vmatpush2.msra.mxu0 0.0
        %1054 = vmatprep.subr.mxu0 0.0
        %1055 = vmatpush2.msra.mxu0 0.0
        %1056 = vmatprep.mubr.f32.mxu0 0.0
        %v1057 = vand.u32 %v799, 4294901760
        %1058 = vmatmul.mubr.f32.gmra.mxu0 %v1057
        %v1059 = vpop.f32.mrf.mxu0
        %v1060 = vadd.f32 %v909, %v1059
        %v1061 = vpop.f32.mrf.mxu0
        %1062 = vdwg.mxu0
        %1063 = vmatprep.subr.mxu0 0.0
        %v1064 = vand.u32 %v816, 4294901760
        %v1065 = vsub.f32 %v816, %v1064
        %1066 = vmatpush1.msra.mxu0 %v1065
        %1067 = vmatprep.subr.mxu0 0.0
        %v1068 = vand.u32 %v815, 4294901760
        %v1069 = vsub.f32 %v815, %v1068
        %1070 = vmatpush1.msra.mxu0 %v1069
        %1071 = vmatprep.subr.mxu0 0.0
        %v1072 = vand.u32 %v814, 4294901760
        %v1073 = vsub.f32 %v814, %v1072
        %1074 = vmatpush1.msra.mxu0 %v1073
        %1075 = vmatprep.subr.mxu0 0.0
        %v1076 = vand.u32 %v813, 4294901760
        %v1077 = vsub.f32 %v813, %v1076
        %1078 = vmatpush1.msra.mxu0 %v1077
        %1079 = vmatprep.subr.mxu0 0.0
        %v1080 = vand.u32 %v812, 4294901760
        %v1081 = vsub.f32 %v812, %v1080
        %1082 = vmatpush1.msra.mxu0 %v1081
        %1083 = vmatprep.subr.mxu0 0.0
        %v1084 = vand.u32 %v811, 4294901760
        %v1085 = vsub.f32 %v811, %v1084
        %1086 = vmatpush1.msra.mxu0 %v1085
        %1087 = vmatprep.subr.mxu0 0.0
        %v1088 = vand.u32 %v810, 4294901760
        %v1089 = vsub.f32 %v810, %v1088
        %1090 = vmatpush1.msra.mxu0 %v1089
        %1091 = vmatprep.subr.mxu0 0.0
        %v1092 = vand.u32 %v809, 4294901760
        %v1093 = vsub.f32 %v809, %v1092
        %1094 = vmatpush1.msra.mxu0 %v1093
        %1095 = vmatprep.subr.mxu0 0.0
        %v1096 = vand.u32 %v808, 4294901760
        %v1097 = vsub.f32 %v808, %v1096
        %1098 = vmatpush1.msra.mxu0 %v1097
        %1099 = vmatprep.subr.mxu0 0.0
        %v1100 = vand.u32 %v807, 4294901760
        %v1101 = vsub.f32 %v807, %v1100
        %1102 = vmatpush1.msra.mxu0 %v1101
        %1103 = vmatprep.subr.mxu0 0.0
        %v1104 = vand.u32 %v806, 4294901760
        %v1105 = vsub.f32 %v806, %v1104
        %1106 = vmatpush1.msra.mxu0 %v1105
        %1107 = vmatprep.subr.mxu0 0.0
        %v1108 = vand.u32 %v805, 4294901760
        %v1109 = vsub.f32 %v805, %v1108
        %1110 = vmatpush1.msra.mxu0 %v1109
        %1111 = vmatprep.subr.mxu0 0.0
        %v1112 = vand.u32 %v804, 4294901760
        %v1113 = vsub.f32 %v804, %v1112
        %1114 = vmatpush1.msra.mxu0 %v1113
        %1115 = vmatprep.subr.mxu0 0.0
        %v1116 = vand.u32 %v803, 4294901760
        %v1117 = vsub.f32 %v803, %v1116
        %1118 = vmatpush1.msra.mxu0 %v1117
        %1119 = vmatprep.subr.mxu0 0.0
        %v1120 = vand.u32 %v802, 4294901760
        %v1121 = vsub.f32 %v802, %v1120
        %1122 = vmatpush1.msra.mxu0 %v1121
        %1123 = vmatprep.subr.mxu0 0.0
        %v1124 = vand.u32 %v801, 4294901760
        %v1125 = vsub.f32 %v801, %v1124
        %1126 = vmatpush1.msra.mxu0 %v1125
        %1127 = vmatprep.subr.mxu0 0.0
        %1128 = vmatpush2.msra.mxu0 0.0
        %1129 = vmatprep.subr.mxu0 0.0
        %1130 = vmatpush2.msra.mxu0 0.0
        %1131 = vmatprep.subr.mxu0 0.0
        %1132 = vmatpush2.msra.mxu0 0.0
        %1133 = vmatprep.subr.mxu0 0.0
        %1134 = vmatpush2.msra.mxu0 0.0
        %1135 = vmatprep.subr.mxu0 0.0
        %1136 = vmatpush2.msra.mxu0 0.0
        %1137 = vmatprep.subr.mxu0 0.0
        %1138 = vmatpush2.msra.mxu0 0.0
        %1139 = vmatprep.subr.mxu0 0.0
        %1140 = vmatpush2.msra.mxu0 0.0
        %1141 = vmatprep.subr.mxu0 0.0
        %1142 = vmatpush2.msra.mxu0 0.0
        %1143 = vmatprep.subr.mxu0 0.0
        %1144 = vmatpush2.msra.mxu0 0.0
        %1145 = vmatprep.subr.mxu0 0.0
        %1146 = vmatpush2.msra.mxu0 0.0
        %1147 = vmatprep.subr.mxu0 0.0
        %1148 = vmatpush2.msra.mxu0 0.0
        %1149 = vmatprep.subr.mxu0 0.0
        %1150 = vmatpush2.msra.mxu0 0.0
        %1151 = vmatprep.subr.mxu0 0.0
        %1152 = vmatpush2.msra.mxu0 0.0
        %1153 = vmatprep.subr.mxu0 0.0
        %1154 = vmatpush2.msra.mxu0 0.0
        %1155 = vmatprep.subr.mxu0 0.0
        %1156 = vmatpush2.msra.mxu0 0.0
        %1157 = vmatprep.subr.mxu0 0.0
        %1158 = vmatpush2.msra.mxu0 0.0
        %1159 = vmatprep.mubr.f32.mxu0 0.0
        %v1160 = vand.u32 %v799, 4294901760
        %v1161 = vsub.f32 %v799, %v1160
        %1162 = vmatmul.mubr.f32.gmra.mxu0 %v1161
        %v1163 = vpop.f32.mrf.mxu0
        %v1164 = vadd.f32 %v1060, %v1163
        %v1165 = vpop.f32.mrf.mxu0
        %1166 = vdwg.mxu0
        %1167 = vmatprep.subr.mxu0 0.0
        %v1168 = vand.u32 %v816, 4294901760
        %1169 = vmatpush1.msra.mxu0 %v1168
        %1170 = vmatprep.subr.mxu0 0.0
        %v1171 = vand.u32 %v815, 4294901760
        %1172 = vmatpush1.msra.mxu0 %v1171
        %1173 = vmatprep.subr.mxu0 0.0
        %v1174 = vand.u32 %v814, 4294901760
        %1175 = vmatpush1.msra.mxu0 %v1174
        %1176 = vmatprep.subr.mxu0 0.0
        %v1177 = vand.u32 %v813, 4294901760
        %1178 = vmatpush1.msra.mxu0 %v1177
        %1179 = vmatprep.subr.mxu0 0.0
        %v1180 = vand.u32 %v812, 4294901760
        %1181 = vmatpush1.msra.mxu0 %v1180
        %1182 = vmatprep.subr.mxu0 0.0
        %v1183 = vand.u32 %v811, 4294901760
        %1184 = vmatpush1.msra.mxu0 %v1183
        %1185 = vmatprep.subr.mxu0 0.0
        %v1186 = vand.u32 %v810, 4294901760
        %1187 = vmatpush1.msra.mxu0 %v1186
        %1188 = vmatprep.subr.mxu0 0.0
        %v1189 = vand.u32 %v809, 4294901760
        %1190 = vmatpush1.msra.mxu0 %v1189
        %1191 = vmatprep.subr.mxu0 0.0
        %v1192 = vand.u32 %v808, 4294901760
        %1193 = vmatpush1.msra.mxu0 %v1192
        %1194 = vmatprep.subr.mxu0 0.0
        %v1195 = vand.u32 %v807, 4294901760
        %1196 = vmatpush1.msra.mxu0 %v1195
        %1197 = vmatprep.subr.mxu0 0.0
        %v1198 = vand.u32 %v806, 4294901760
        %1199 = vmatpush1.msra.mxu0 %v1198
        %1200 = vmatprep.subr.mxu0 0.0
        %v1201 = vand.u32 %v805, 4294901760
        %1202 = vmatpush1.msra.mxu0 %v1201
        %1203 = vmatprep.subr.mxu0 0.0
        %v1204 = vand.u32 %v804, 4294901760
        %1205 = vmatpush1.msra.mxu0 %v1204
        %1206 = vmatprep.subr.mxu0 0.0
        %v1207 = vand.u32 %v803, 4294901760
        %1208 = vmatpush1.msra.mxu0 %v1207
        %1209 = vmatprep.subr.mxu0 0.0
        %v1210 = vand.u32 %v802, 4294901760
        %1211 = vmatpush1.msra.mxu0 %v1210
        %1212 = vmatprep.subr.mxu0 0.0
        %v1213 = vand.u32 %v801, 4294901760
        %1214 = vmatpush1.msra.mxu0 %v1213
        %1215 = vmatprep.subr.mxu0 0.0
        %1216 = vmatpush2.msra.mxu0 0.0
        %1217 = vmatprep.subr.mxu0 0.0
        %1218 = vmatpush2.msra.mxu0 0.0
        %1219 = vmatprep.subr.mxu0 0.0
        %1220 = vmatpush2.msra.mxu0 0.0
        %1221 = vmatprep.subr.mxu0 0.0
        %1222 = vmatpush2.msra.mxu0 0.0
        %1223 = vmatprep.subr.mxu0 0.0
        %1224 = vmatpush2.msra.mxu0 0.0
        %1225 = vmatprep.subr.mxu0 0.0
        %1226 = vmatpush2.msra.mxu0 0.0
        %1227 = vmatprep.subr.mxu0 0.0
        %1228 = vmatpush2.msra.mxu0 0.0
        %1229 = vmatprep.subr.mxu0 0.0
        %1230 = vmatpush2.msra.mxu0 0.0
        %1231 = vmatprep.subr.mxu0 0.0
        %1232 = vmatpush2.msra.mxu0 0.0
        %1233 = vmatprep.subr.mxu0 0.0
        %1234 = vmatpush2.msra.mxu0 0.0
        %1235 = vmatprep.subr.mxu0 0.0
        %1236 = vmatpush2.msra.mxu0 0.0
        %1237 = vmatprep.subr.mxu0 0.0
        %1238 = vmatpush2.msra.mxu0 0.0
        %1239 = vmatprep.subr.mxu0 0.0
        %1240 = vmatpush2.msra.mxu0 0.0
        %1241 = vmatprep.subr.mxu0 0.0
        %1242 = vmatpush2.msra.mxu0 0.0
        %1243 = vmatprep.subr.mxu0 0.0
        %1244 = vmatpush2.msra.mxu0 0.0
        %1245 = vmatprep.subr.mxu0 0.0
        %1246 = vmatpush2.msra.mxu0 0.0
        %1247 = vmatprep.mubr.f32.mxu0 0.0
        %v1248 = vand.u32 %v799, 4294901760
        %v1249 = vsub.f32 %v799, %v1248
        %v1250 = vand.u32 %v1249, 4294901760
        %1251 = vmatmul.mubr.f32.gmra.mxu0 %v1250
        %v1252 = vpop.f32.mrf.mxu0
        %v1253 = vadd.f32 %v1164, %v1252
        %v1254 = vpop.f32.mrf.mxu0
        %1255 = vdwg.mxu0
        %1256 = vmatprep.subr.mxu0 0.0
        %v1257 = vand.u32 %v816, 4294901760
        %v1258 = vsub.f32 %v816, %v1257
        %v1259 = vand.u32 %v1258, 4294901760
        %1260 = vmatpush1.msra.mxu0 %v1259
        %1261 = vmatprep.subr.mxu0 0.0
        %v1262 = vand.u32 %v815, 4294901760
        %v1263 = vsub.f32 %v815, %v1262
        %v1264 = vand.u32 %v1263, 4294901760
        %1265 = vmatpush1.msra.mxu0 %v1264
        %1266 = vmatprep.subr.mxu0 0.0
        %v1267 = vand.u32 %v814, 4294901760
        %v1268 = vsub.f32 %v814, %v1267
        %v1269 = vand.u32 %v1268, 4294901760
        %1270 = vmatpush1.msra.mxu0 %v1269
        %1271 = vmatprep.subr.mxu0 0.0
        %v1272 = vand.u32 %v813, 4294901760
        %v1273 = vsub.f32 %v813, %v1272
        %v1274 = vand.u32 %v1273, 4294901760
        %1275 = vmatpush1.msra.mxu0 %v1274
        %1276 = vmatprep.subr.mxu0 0.0
        %v1277 = vand.u32 %v812, 4294901760
        %v1278 = vsub.f32 %v812, %v1277
        %v1279 = vand.u32 %v1278, 4294901760
        %1280 = vmatpush1.msra.mxu0 %v1279
        %1281 = vmatprep.subr.mxu0 0.0
        %v1282 = vand.u32 %v811, 4294901760
        %v1283 = vsub.f32 %v811, %v1282
        %v1284 = vand.u32 %v1283, 4294901760
        %1285 = vmatpush1.msra.mxu0 %v1284
        %1286 = vmatprep.subr.mxu0 0.0
        %v1287 = vand.u32 %v810, 4294901760
        %v1288 = vsub.f32 %v810, %v1287
        %v1289 = vand.u32 %v1288, 4294901760
        %1290 = vmatpush1.msra.mxu0 %v1289
        %1291 = vmatprep.subr.mxu0 0.0
        %v1292 = vand.u32 %v809, 4294901760
        %v1293 = vsub.f32 %v809, %v1292
        %v1294 = vand.u32 %v1293, 4294901760
        %1295 = vmatpush1.msra.mxu0 %v1294
        %1296 = vmatprep.subr.mxu0 0.0
        %v1297 = vand.u32 %v808, 4294901760
        %v1298 = vsub.f32 %v808, %v1297
        %v1299 = vand.u32 %v1298, 4294901760
        %1300 = vmatpush1.msra.mxu0 %v1299
        %1301 = vmatprep.subr.mxu0 0.0
        %v1302 = vand.u32 %v807, 4294901760
        %v1303 = vsub.f32 %v807, %v1302
        %v1304 = vand.u32 %v1303, 4294901760
        %1305 = vmatpush1.msra.mxu0 %v1304
        %1306 = vmatprep.subr.mxu0 0.0
        %v1307 = vand.u32 %v806, 4294901760
        %v1308 = vsub.f32 %v806, %v1307
        %v1309 = vand.u32 %v1308, 4294901760
        %1310 = vmatpush1.msra.mxu0 %v1309
        %1311 = vmatprep.subr.mxu0 0.0
        %v1312 = vand.u32 %v805, 4294901760
        %v1313 = vsub.f32 %v805, %v1312
        %v1314 = vand.u32 %v1313, 4294901760
        %1315 = vmatpush1.msra.mxu0 %v1314
        %1316 = vmatprep.subr.mxu0 0.0
        %v1317 = vand.u32 %v804, 4294901760
        %v1318 = vsub.f32 %v804, %v1317
        %v1319 = vand.u32 %v1318, 4294901760
        %1320 = vmatpush1.msra.mxu0 %v1319
        %1321 = vmatprep.subr.mxu0 0.0
        %v1322 = vand.u32 %v803, 4294901760
        %v1323 = vsub.f32 %v803, %v1322
        %v1324 = vand.u32 %v1323, 4294901760
        %1325 = vmatpush1.msra.mxu0 %v1324
        %1326 = vmatprep.subr.mxu0 0.0
        %v1327 = vand.u32 %v802, 4294901760
        %v1328 = vsub.f32 %v802, %v1327
        %v1329 = vand.u32 %v1328, 4294901760
        %1330 = vmatpush1.msra.mxu0 %v1329
        %1331 = vmatprep.subr.mxu0 0.0
        %v1332 = vand.u32 %v801, 4294901760
        %v1333 = vsub.f32 %v801, %v1332
        %v1334 = vand.u32 %v1333, 4294901760
        %1335 = vmatpush1.msra.mxu0 %v1334
        %1336 = vmatprep.subr.mxu0 0.0
        %1337 = vmatpush2.msra.mxu0 0.0
        %1338 = vmatprep.subr.mxu0 0.0
        %1339 = vmatpush2.msra.mxu0 0.0
        %1340 = vmatprep.subr.mxu0 0.0
        %1341 = vmatpush2.msra.mxu0 0.0
        %1342 = vmatprep.subr.mxu0 0.0
        %1343 = vmatpush2.msra.mxu0 0.0
        %1344 = vmatprep.subr.mxu0 0.0
        %1345 = vmatpush2.msra.mxu0 0.0
        %1346 = vmatprep.subr.mxu0 0.0
        %1347 = vmatpush2.msra.mxu0 0.0
        %1348 = vmatprep.subr.mxu0 0.0
        %1349 = vmatpush2.msra.mxu0 0.0
        %1350 = vmatprep.subr.mxu0 0.0
        %1351 = vmatpush2.msra.mxu0 0.0
        %1352 = vmatprep.subr.mxu0 0.0
        %1353 = vmatpush2.msra.mxu0 0.0
        %1354 = vmatprep.subr.mxu0 0.0
        %1355 = vmatpush2.msra.mxu0 0.0
        %1356 = vmatprep.subr.mxu0 0.0
        %1357 = vmatpush2.msra.mxu0 0.0
        %1358 = vmatprep.subr.mxu0 0.0
        %1359 = vmatpush2.msra.mxu0 0.0
        %1360 = vmatprep.subr.mxu0 0.0
        %1361 = vmatpush2.msra.mxu0 0.0
        %1362 = vmatprep.subr.mxu0 0.0
        %1363 = vmatpush2.msra.mxu0 0.0
        %1364 = vmatprep.subr.mxu0 0.0
        %1365 = vmatpush2.msra.mxu0 0.0
        %1366 = vmatprep.subr.mxu0 0.0
        %1367 = vmatpush2.msra.mxu0 0.0
        %1368 = vmatprep.mubr.f32.mxu0 0.0
        %v1369 = vand.u32 %v799, 4294901760
        %1370 = vmatmul.mubr.f32.gmra.mxu0 %v1369
        %v1371 = vpop.f32.mrf.mxu0
        %v1372 = vadd.f32 %v1253, %v1371
        %v1373 = vpop.f32.mrf.mxu0
        %1374 = vdwg.mxu0
        %1375 = vmatprep.subr.mxu0 0.0
        %v1376 = vand.u32 %v816, 4294901760
        %1377 = vmatpush1.msra.mxu0 %v1376
        %1378 = vmatprep.subr.mxu0 0.0
        %v1379 = vand.u32 %v815, 4294901760
        %1380 = vmatpush1.msra.mxu0 %v1379
        %1381 = vmatprep.subr.mxu0 0.0
        %v1382 = vand.u32 %v814, 4294901760
        %1383 = vmatpush1.msra.mxu0 %v1382
        %1384 = vmatprep.subr.mxu0 0.0
        %v1385 = vand.u32 %v813, 4294901760
        %1386 = vmatpush1.msra.mxu0 %v1385
        %1387 = vmatprep.subr.mxu0 0.0
        %v1388 = vand.u32 %v812, 4294901760
        %1389 = vmatpush1.msra.mxu0 %v1388
        %1390 = vmatprep.subr.mxu0 0.0
        %v1391 = vand.u32 %v811, 4294901760
        %1392 = vmatpush1.msra.mxu0 %v1391
        %1393 = vmatprep.subr.mxu0 0.0
        %v1394 = vand.u32 %v810, 4294901760
        %1395 = vmatpush1.msra.mxu0 %v1394
        %1396 = vmatprep.subr.mxu0 0.0
        %v1397 = vand.u32 %v809, 4294901760
        %1398 = vmatpush1.msra.mxu0 %v1397
        %1399 = vmatprep.subr.mxu0 0.0
        %v1400 = vand.u32 %v808, 4294901760
        %1401 = vmatpush1.msra.mxu0 %v1400
        %1402 = vmatprep.subr.mxu0 0.0
        %v1403 = vand.u32 %v807, 4294901760
        %1404 = vmatpush1.msra.mxu0 %v1403
        %1405 = vmatprep.subr.mxu0 0.0
        %v1406 = vand.u32 %v806, 4294901760
        %1407 = vmatpush1.msra.mxu0 %v1406
        %1408 = vmatprep.subr.mxu0 0.0
        %v1409 = vand.u32 %v805, 4294901760
        %1410 = vmatpush1.msra.mxu0 %v1409
        %1411 = vmatprep.subr.mxu0 0.0
        %v1412 = vand.u32 %v804, 4294901760
        %1413 = vmatpush1.msra.mxu0 %v1412
        %1414 = vmatprep.subr.mxu0 0.0
        %v1415 = vand.u32 %v803, 4294901760
        %1416 = vmatpush1.msra.mxu0 %v1415
        %1417 = vmatprep.subr.mxu0 0.0
        %v1418 = vand.u32 %v802, 4294901760
        %1419 = vmatpush1.msra.mxu0 %v1418
        %1420 = vmatprep.subr.mxu0 0.0
        %v1421 = vand.u32 %v801, 4294901760
        %1422 = vmatpush1.msra.mxu0 %v1421
        %1423 = vmatprep.subr.mxu0 0.0
        %1424 = vmatpush2.msra.mxu0 0.0
        %1425 = vmatprep.subr.mxu0 0.0
        %1426 = vmatpush2.msra.mxu0 0.0
        %1427 = vmatprep.subr.mxu0 0.0
        %1428 = vmatpush2.msra.mxu0 0.0
        %1429 = vmatprep.subr.mxu0 0.0
        %1430 = vmatpush2.msra.mxu0 0.0
        %1431 = vmatprep.subr.mxu0 0.0
        %1432 = vmatpush2.msra.mxu0 0.0
        %1433 = vmatprep.subr.mxu0 0.0
        %1434 = vmatpush2.msra.mxu0 0.0
        %1435 = vmatprep.subr.mxu0 0.0
        %1436 = vmatpush2.msra.mxu0 0.0
        %1437 = vmatprep.subr.mxu0 0.0
        %1438 = vmatpush2.msra.mxu0 0.0
        %1439 = vmatprep.subr.mxu0 0.0
        %1440 = vmatpush2.msra.mxu0 0.0
        %1441 = vmatprep.subr.mxu0 0.0
        %1442 = vmatpush2.msra.mxu0 0.0
        %1443 = vmatprep.subr.mxu0 0.0
        %1444 = vmatpush2.msra.mxu0 0.0
        %1445 = vmatprep.subr.mxu0 0.0
        %1446 = vmatpush2.msra.mxu0 0.0
        %1447 = vmatprep.subr.mxu0 0.0
        %1448 = vmatpush2.msra.mxu0 0.0
        %1449 = vmatprep.subr.mxu0 0.0
        %1450 = vmatpush2.msra.mxu0 0.0
        %1451 = vmatprep.subr.mxu0 0.0
        %1452 = vmatpush2.msra.mxu0 0.0
        %1453 = vmatprep.subr.mxu0 0.0
        %1454 = vmatpush2.msra.mxu0 0.0
        %1455 = vmatprep.mubr.f32.mxu0 0.0
        %v1456 = vand.u32 %v799, 4294901760
        %1457 = vmatmul.mubr.f32.gmra.mxu0 %v1456
        %v1458 = vpop.f32.mrf.mxu0
        %v1459 = vadd.f32 %v1372, %v1458
        %v1460 = vpop.f32.mrf.mxu0
        %1461 = vdwg.mxu0
        %vm1462 = vcmask 261120
        %v1463 = vsel %vm1462, %v1459, 0.0
        %1464 = vadd.xlane.f32.xlu0 %v1463
        %v1465 = vpop.xlane.xlu0 %1464
        %v1466 = vrcp.pop 32.0
        %v1467 = vmul.f32 %v1465, %v1466
        %v1468 = vsub.f32 %v1459, %v1467
        %v1469 = vmul.f32 %v1468, %v1468
        %v1470 = vsel %vm1462, %v1469, 0.0
        %1471 = vadd.xlane.f32.xlu0 %v1470
        %v1472 = vpop.xlane.xlu0 %1471
        %v1473 = vmul.f32 %v1472, %v1466
        %v1474 = vadd.f32 %v1473, 1e-05
        %v1475 = vrsqrt.pop %v1474
        %v1476 = vmul.f32 %v1468, %v1475
        %v1477 = vlaneseq
        %v1478 = vshrl.u32 %v1477, 7
        %v1479 = vsub.s32 1, %v1478
        %v1480 = vrot.slane %v800, %v1479
        %v1481 = vmul.f32 %v1476, %v1480
        %v1482 = vlaneseq
        %v1483 = vshrl.u32 %v1482, 7
        %v1484 = vsub.s32 2, %v1483
        %v1485 = vrot.slane %v800, %v1484
        %v1486 = vadd.f32 %v1481, %v1485
        %vm1487 = vcmp.ge.f32.partialorder %v1486, 0.0
        %v1488 = vmul.f32 %v1486, 0.01
        %v1489 = vsel %vm1487, %v1486, %v1488
        %1490 = vst.msk [vmem:[%s215] sm:$0xff] %vm1462, %v1489
        %s1491 = sand.u32 %s137, 1
        %s1492 = scalar_lea.sflag [#allocation3], %s1491
        %s1493 = sand.u32 %s137, 1
        %s1494 = smul.addr %s1493, 8
        %s1495 = scalar_lea.vmem [#allocation2], %s1494
        // Predicated region
        $region41: #{tpu_custom_call.1} parent=39 // pred_check
          %p1496 = pneg %p147
        $region42: #{tpu_custom_call.1} parent=39 // pred_check_branch
          %1498 = sbr.rel (%p1496) target = $region44
        $region43: #{tpu_custom_call.1} parent=39 // pred_region
          %s1500 = ssub.s32 128, 128
          %1501 = vsyncadd %s1492, %s1500
          %s1502 = smul.addr %s19, 128
          %s1503 = scalar_lea.hbm %s5, %s1502
          %s1505 = sshll.u32 %s1495, 4
          %s1506 = int_to_ptr.vmem [resolvable:$true] %s1505
          %1508 = dma.vmem_to_hbm [thread:$0]  %s1506, 128, %s1503, %s1492
        $region44: #{tpu_custom_call.1} parent=39 // pred_fallthru
          _
      $region40: #{tpu_custom_call.1} parent=5 // pred_fallthru
        _
      %p1509 = scmp.le.s32.totalorder 2, %s14
      // Predicated region
      $region45: #{tpu_custom_call.1} parent=5 // pred_check
        %p1510 = pneg %p1509
      $region46: #{tpu_custom_call.1} parent=5 // pred_check_branch
        %1512 = sbr.rel (%p1510) target = $region48
      $region47: #{tpu_custom_call.1} parent=5 // pred_region
        %s1513 = ssub.s32 %s14, 2
        // Predicated region
        $region49: #{tpu_custom_call.1} parent=47 // pred_check
          %p1514 = pneg %p153
        $region50: #{tpu_custom_call.1} parent=47 // pred_check_branch
          %1516 = sbr.rel (%p1514) target = $region52
        $region51: #{tpu_custom_call.1} parent=47 // pred_region
          %s1517 = sand.u32 %s138, 1
          %s1518 = scalar_lea.sflag [#allocation3], %s1517
          %s1519 = sand.u32 %s138, 1
          %s1520 = smul.addr %s1519, 8
          %s1521 = scalar_lea.vmem [#allocation2], %s1520
          %1522 = dma.done %s1518, 128
        $region52: #{tpu_custom_call.1} parent=47 // pred_fallthru
          _
      $region48: #{tpu_custom_call.1} parent=5 // pred_fallthru
        _
    $region6: #{tpu_custom_call.1} parent=1 // loop_footer
      %s18 = sadd.s32 1, %s14
    $region7: #{tpu_custom_call.1} parent=1 // loop_footer_branch
      %13 = sbr.rel target = $region3
    $region8: #{tpu_custom_call.1} parent=1 // loop_exit
      _
    %1523 = vsyncpa [#allocation3], 1
    %s1524 = scalar_lea.sflag [#allocation3], 1
    %1525 = vsyncpa %s1524, 1

</llo_original>
